<compile_context>
chip_gen: v7x
topology: tpu7x:2x2x1
jax: 0.10.0
libtpu: 0.0.40
codegen_flags: <defaults>
</compile_context>

<pallas_src>
import functools

import jax
import jax.numpy as jnp
from jax.experimental import pallas as pl
from jax.experimental.pallas import tpu as pltpu


def _round_up(x, m):
    return (x + m - 1) // m * m


def _sigmoid(x):
    # sigmoid(x) = 0.5*(tanh(0.5*x)+1): one EUP op instead of exp + reciprocal.
    return 0.5 * jnp.tanh(0.5 * x) + 0.5


def lstm_seq2one_kernel(x_ref, wih_ref, whh_ref, b_ref, wfc_ref, bfc_ref,
                        out_ref, xg_ref, *, seq_len, batch, hidden, unroll):
    S, B, H = seq_len, batch, hidden

    # (1) One bf16 MXU pass for the input projection of ALL timesteps:
    #     (S*B, Ip)bf16 @ (Ip, 4Hp)bf16 -> f32 accumulate (+ bias) into VMEM.
    xg_ref[...] = (
        jnp.dot(x_ref[...], wih_ref[...], preferred_element_type=jnp.float32)
        + b_ref[...])

    # (2) Hoist the recurrent weights out of the loop (bf16, four lane-aligned
    #     Hp-wide gate blocks) so they are not re-streamed every unrolled step.
    whh = whh_ref[...]
    w_i = whh[:, 0 * H:1 * H]
    w_f = whh[:, 1 * H:2 * H]
    w_g = whh[:, 2 * H:3 * H]
    w_o = whh[:, 3 * H:4 * H]

    def step(t, carry):
        h, c = carry
        hb = h.astype(jnp.bfloat16)
        row = pl.multiple_of(t * B, 8)
        xg = xg_ref[pl.ds(row, B), :]
        # PyTorch gate order: i, f, g, o.  Four per-gate MXU pushes so each
        # gate's EUP transcendental overlaps the next gate's MXU drain.
        i = _sigmoid(xg[:, 0 * H:1 * H] +
                     jnp.dot(hb, w_i, preferred_element_type=jnp.float32))
        f = _sigmoid(xg[:, 1 * H:2 * H] +
                     jnp.dot(hb, w_f, preferred_element_type=jnp.float32))
        g = jnp.tanh(xg[:, 2 * H:3 * H] +
                     jnp.dot(hb, w_g, preferred_element_type=jnp.float32))
        o = _sigmoid(xg[:, 3 * H:4 * H] +
                     jnp.dot(hb, w_o, preferred_element_type=jnp.float32))
        c_new = f * c + i * g
        h_new = o * jnp.tanh(c_new)
        return h_new, c_new

    h0 = jnp.zeros((B, H), jnp.float32)
    c0 = jnp.zeros((B, H), jnp.float32)
    h, _ = jax.lax.fori_loop(0, S, step, (h0, c0), unroll=unroll)

    # (3) Fused FC + sigmoid on the final hidden state; lane-dense store.
    logits = (jnp.dot(h.astype(jnp.bfloat16), wfc_ref[...],
                      preferred_element_type=jnp.float32) + bfc_ref[...])
    out_ref[...] = _sigmoid(logits)


def prepare_weights(w_ih, w_hh, b_ih, b_hh, w_fc, b_fc):
    """One-off weight formatting: per-gate zero-pad so each gate occupies its
    own lane-aligned Hp-wide column block, transpose for (row, 4Hp) matmuls,
    and cast MXU operands to bf16.  Done OUTSIDE the per-call path."""
    I = w_ih.shape[1]
    H = w_hh.shape[1]
    O = w_fc.shape[0]
    Ip = _round_up(I, 128)
    Hp = _round_up(H, 128)
    Op = _round_up(O, 128)
    f32, bf16 = jnp.float32, jnp.bfloat16

    wih_p = jnp.pad(w_ih.astype(f32).reshape(4, H, I),
                    ((0, 0), (0, Hp - H), (0, Ip - I))).reshape(4 * Hp, Ip)
    whh_p = jnp.pad(w_hh.astype(f32).reshape(4, H, H),
                    ((0, 0), (0, Hp - H), (0, Hp - H))).reshape(4 * Hp, Hp)
    b_p = jnp.pad((b_ih + b_hh).astype(f32).reshape(4, H),
                  ((0, 0), (0, Hp - H))).reshape(1, 4 * Hp)
    wfc_p = jnp.pad(w_fc.astype(f32), ((0, Op - O), (0, Hp - H)))
    bfc_p = jnp.pad(b_fc.astype(f32), (0, Op - O)).reshape(1, Op)

    wih_t = wih_p.T.astype(bf16)     # (Ip, 4Hp)
    whh_t = whh_p.T.astype(bf16)     # (Hp, 4Hp)
    wfc_t = wfc_p.T.astype(bf16)     # (Hp, Op)
    return wih_t, whh_t, b_p, wfc_t, bfc_p


@functools.partial(jax.jit, static_argnames=("out_size",))
def lstm_seq2one(x, wih_t, whh_t, b_p, wfc_t, bfc_p, *, out_size):
    """x: (B, S, I) f32; weights pre-formatted by prepare_weights."""
    B, S, I = x.shape
    Ip = wih_t.shape[0]
    Hp = whh_t.shape[0]
    Op = wfc_t.shape[1]
    Bp = max(8, _round_up(B, 8))     # f32 sublane granularity

    # x: (B,S,I) -> (S,Bp,Ip) zero-padded bf16 -> (S*Bp, Ip)
    x_sbi = jnp.transpose(x, (1, 0, 2)).astype(jnp.bfloat16)
    x_pad = jnp.pad(x_sbi, ((0, 0), (0, Bp - B), (0, Ip - I)))
    x2d = x_pad.reshape(S * Bp, Ip)

    kernel = functools.partial(
        lstm_seq2one_kernel, seq_len=S, batch=Bp, hidden=Hp,
        unroll=S if S <= 32 else 8)   # bounded unroll for long sequences

    vmem = pl.BlockSpec(memory_space=pltpu.MemorySpace.VMEM)
    out_pad = pl.pallas_call(
        kernel,
        out_shape=jax.ShapeDtypeStruct((Bp, Op), jnp.float32),
        in_specs=[vmem] * 6,          # whole arrays in VMEM, no grid/pipeline
        out_specs=vmem,
        scratch_shapes=[
            pltpu.VMEM((S * Bp, 4 * Hp), jnp.float32),   # x @ W_ih^T (+ bias)
        ],
    )(x2d, wih_t, whh_t, b_p, wfc_t, bfc_p)
    # TODO(synk): for long sequences (S >~ 1k) or large batches, time-chunk the
    # input projection onto an "arbitrary" grid axis (carrying h/c in scratch)
    # and add a "parallel" batch axis so the S-proportional scratch stays
    # within v7x's 64 MiB VMEM and the 2 TensorCores are both used.

    return out_pad[:B, :out_size]


def reference_lstm_seq2one(x, w_ih, w_hh, b_ih, b_hh, w_fc, b_fc):
    """Pure-JAX f32 reference matching torch.nn.LSTM(batch_first=True)."""
    B, S, I = x.shape
    H = w_hh.shape[1]

    def step(carry, x_t):
        h, c = carry
        gates = x_t @ w_ih.T + h @ w_hh.T + b_ih + b_hh
        i = jax.nn.sigmoid(gates[:, 0 * H:1 * H])
        f = jax.nn.sigmoid(gates[:, 1 * H:2 * H])
        g = jnp.tanh(gates[:, 2 * H:3 * H])
        o = jax.nn.sigmoid(gates[:, 3 * H:4 * H])
        c = f * c + i * g
        h = o * jnp.tanh(c)
        return (h, c), None

    h0 = jnp.zeros((B, H), jnp.float32)
    c0 = jnp.zeros((B, H), jnp.float32)
    (h, _), _ = jax.lax.scan(step, (h0, c0), jnp.transpose(x, (1, 0, 2)))
    return jax.nn.sigmoid(h @ w_fc.T + b_fc)


if __name__ == "__main__":
    # Small shapes consistent with the module: batch=2, seq=8, input=16,
    # hidden=32, output=4.
    B, S, I, H, O = 2, 8, 16, 32, 4

    key = jax.random.PRNGKey(0)
    ks = jax.random.split(key, 8)
    bound = 1.0 / (H ** 0.5)   # PyTorch default uniform(-1/sqrt(H), 1/sqrt(H))

    x = jax.random.normal(ks[0], (B, S, I), dtype=jnp.float32)
    w_ih = jax.random.uniform(ks[1], (4 * H, I), jnp.float32, -bound, bound)
    w_hh = jax.random.uniform(ks[2], (4 * H, H), jnp.float32, -bound, bound)
    b_ih = jax.random.uniform(ks[3], (4 * H,), jnp.float32, -bound, bound)
    b_hh = jax.random.uniform(ks[4], (4 * H,), jnp.float32, -bound, bound)
    w_fc = jax.random.uniform(ks[5], (O, H), jnp.float32, -bound, bound)
    b_fc = jax.random.uniform(ks[6], (O,), jnp.float32, -bound, bound)

    # One-off weight formatting (off the per-call critical path).
    params = prepare_weights(w_ih, w_hh, b_ih, b_hh, w_fc, b_fc)
    params = tuple(jax.block_until_ready(p) for p in params)

    out = lstm_seq2one(x, *params, out_size=O)
    out = jax.block_until_ready(out)

    ref = reference_lstm_seq2one(x, w_ih, w_hh, b_ih, b_hh, w_fc, b_fc)
    assert out.shape == (B, O), out.shape
    # bf16 MXU operands (f32 accumulation): tolerance re-baselined vs. the
    # all-f32 reference.
    assert jnp.allclose(out, ref, atol=2e-2, rtol=2e-2), (out, ref)

    print("KERNEL_OK")
</pallas_src>

<mosaic_0001>
module attributes {stable_mosaic.version = 11 : i64} {
  func.func @lstm_seq2one_kernel(%arg0: memref<64x128xbf16, #tpu.memory_space<vmem>>, %arg1: memref<128x512xbf16, #tpu.memory_space<vmem>>, %arg2: memref<128x512xbf16, #tpu.memory_space<vmem>>, %arg3: memref<1x512xf32, #tpu.memory_space<vmem>>, %arg4: memref<128x128xbf16, #tpu.memory_space<vmem>>, %arg5: memref<1x128xf32, #tpu.memory_space<vmem>>, %arg6: memref<8x128xf32, #tpu.memory_space<vmem>>, %arg7: memref<64x512xf32, #tpu.memory_space<vmem>>) attributes {dimension_semantics = [], scalar_prefetch = 0 : i64, scratch_operands = 1 : i64, tpu.core_type = #tpu.core_type<tc>} {
    %c0 = arith.constant 0 : index
    %c0_0 = arith.constant 0 : index
    %0 = vector.load %arg0[%c0, %c0_0] : memref<64x128xbf16, #tpu.memory_space<vmem>>, vector<64x128xbf16>
    %c0_1 = arith.constant 0 : index
    %c0_2 = arith.constant 0 : index
    %1 = vector.load %arg1[%c0_1, %c0_2] : memref<128x512xbf16, #tpu.memory_space<vmem>>, vector<128x512xbf16>
    %cst = arith.constant dense<0.000000e+00> : vector<64x512xf32>
    %2 = tpu.matmul %0, %1, %cst {dimension_numbers = #tpu.dot_dimension_numbers<[1], [0], [0], [1], [0, 0, 1, 1], [], []>} : vector<64x128xbf16>, vector<128x512xbf16>, vector<64x512xf32> -> vector<64x512xf32>
    %c0_3 = arith.constant 0 : index
    %c0_4 = arith.constant 0 : index
    %3 = vector.load %arg3[%c0_3, %c0_4] : memref<1x512xf32, #tpu.memory_space<vmem>>, vector<1x512xf32>
    %4 = vector.broadcast %3 : vector<1x512xf32> to vector<64x512xf32>
    %5 = arith.addf %2, %4 : vector<64x512xf32>
    %c0_5 = arith.constant 0 : index
    %c0_6 = arith.constant 0 : index
    %6 = vector.load %arg7[%c0_5, %c0_6] : memref<64x512xf32, #tpu.memory_space<vmem>>, vector<64x512xf32>
    tpu.vector_store %arg7[%c0_5, %c0_6], %5 {strides = array<i32>} : memref<64x512xf32, #tpu.memory_space<vmem>>, vector<64x512xf32>,
    %c0_7 = arith.constant 0 : index
    %c0_8 = arith.constant 0 : index
    %7 = vector.load %arg2[%c0_7, %c0_8] : memref<128x512xbf16, #tpu.memory_space<vmem>>, vector<128x512xbf16>
    %8 = vector.extract_strided_slice %7 {offsets = [0, 0], sizes = [128, 128], strides = [1, 1]} : vector<128x512xbf16> to vector<128x128xbf16>
    %9 = vector.extract_strided_slice %7 {offsets = [0, 128], sizes = [128, 128], strides = [1, 1]} : vector<128x512xbf16> to vector<128x128xbf16>
    %10 = vector.extract_strided_slice %7 {offsets = [0, 256], sizes = [128, 128], strides = [1, 1]} : vector<128x512xbf16> to vector<128x128xbf16>
    %11 = vector.extract_strided_slice %7 {offsets = [0, 384], sizes = [128, 128], strides = [1, 1]} : vector<128x512xbf16> to vector<128x128xbf16>
    %cst_9 = arith.constant 0.000000e+00 : f32
    %12 = vector.broadcast %cst_9 : f32 to vector<8x128xf32>
    %cst_10 = arith.constant 0.000000e+00 : f32
    %13 = vector.broadcast %cst_10 : f32 to vector<8x128xf32>
    %c0_i32 = arith.constant 0 : i32
    %14 = arith.truncf %12 : vector<8x128xf32> to vector<8x128xbf16>
    %c8_i32 = arith.constant 8 : i32
    %15 = arith.muli %c0_i32, %c8_i32 : i32
    %16 = tpu.assume_multiple %15, 8 : i32
    %17 = arith.index_cast %16 : i32 to index
    %c0_11 = arith.constant 0 : index
    %18 = vector.load %arg7[%17, %c0_11] : memref<64x512xf32, #tpu.memory_space<vmem>>, vector<8x512xf32>
    %19 = vector.extract_strided_slice %18 {offsets = [0, 0], sizes = [8, 128], strides = [1, 1]} : vector<8x512xf32> to vector<8x128xf32>
    %cst_12 = arith.constant dense<0.000000e+00> : vector<8x128xf32>
    %20 = tpu.matmul %14, %8, %cst_12 {dimension_numbers = #tpu.dot_dimension_numbers<[1], [0], [0], [1], [0, 0, 1, 1], [], []>} : vector<8x128xbf16>, vector<128x128xbf16>, vector<8x128xf32> -> vector<8x128xf32>
    %21 = arith.addf %19, %20 : vector<8x128xf32>
    %cst_13 = arith.constant 5.000000e-01 : f32
    %22 = vector.broadcast %cst_13 : f32 to vector<8x128xf32>
    %23 = arith.mulf %22, %21 : vector<8x128xf32>
    %24 = math.tanh %23 : vector<8x128xf32>
    %cst_14 = arith.constant 5.000000e-01 : f32
    %25 = vector.broadcast %cst_14 : f32 to vector<8x128xf32>
    %26 = arith.mulf %25, %24 : vector<8x128xf32>
    %cst_15 = arith.constant 5.000000e-01 : f32
    %27 = vector.broadcast %cst_15 : f32 to vector<8x128xf32>
    %28 = arith.addf %26, %27 : vector<8x128xf32>
    %29 = vector.extract_strided_slice %18 {offsets = [0, 128], sizes = [8, 128], strides = [1, 1]} : vector<8x512xf32> to vector<8x128xf32>
    %cst_16 = arith.constant dense<0.000000e+00> : vector<8x128xf32>
    %30 = tpu.matmul %14, %9, %cst_16 {dimension_numbers = #tpu.dot_dimension_numbers<[1], [0], [0], [1], [0, 0, 1, 1], [], []>} : vector<8x128xbf16>, vector<128x128xbf16>, vector<8x128xf32> -> vector<8x128xf32>
    %31 = arith.addf %29, %30 : vector<8x128xf32>
    %cst_17 = arith.constant 5.000000e-01 : f32
    %32 = vector.broadcast %cst_17 : f32 to vector<8x128xf32>
    %33 = arith.mulf %32, %31 : vector<8x128xf32>
    %34 = math.tanh %33 : vector<8x128xf32>
    %cst_18 = arith.constant 5.000000e-01 : f32
    %35 = vector.broadcast %cst_18 : f32 to vector<8x128xf32>
    %36 = arith.mulf %35, %34 : vector<8x128xf32>
    %cst_19 = arith.constant 5.000000e-01 : f32
    %37 = vector.broadcast %cst_19 : f32 to vector<8x128xf32>
    %38 = arith.addf %36, %37 : vector<8x128xf32>
    %39 = vector.extract_strided_slice %18 {offsets = [0, 256], sizes = [8, 128], strides = [1, 1]} : vector<8x512xf32> to vector<8x128xf32>
    %cst_20 = arith.constant dense<0.000000e+00> : vector<8x128xf32>
    %40 = tpu.matmul %14, %10, %cst_20 {dimension_numbers = #tpu.dot_dimension_numbers<[1], [0], [0], [1], [0, 0, 1, 1], [], []>} : vector<8x128xbf16>, vector<128x128xbf16>, vector<8x128xf32> -> vector<8x128xf32>
    %41 = arith.addf %39, %40 : vector<8x128xf32>
    %42 = math.tanh %41 : vector<8x128xf32>
    %43 = vector.extract_strided_slice %18 {offsets = [0, 384], sizes = [8, 128], strides = [1, 1]} : vector<8x512xf32> to vector<8x128xf32>
    %cst_21 = arith.constant dense<0.000000e+00> : vector<8x128xf32>
    %44 = tpu.matmul %14, %11, %cst_21 {dimension_numbers = #tpu.dot_dimension_numbers<[1], [0], [0], [1], [0, 0, 1, 1], [], []>} : vector<8x128xbf16>, vector<128x128xbf16>, vector<8x128xf32> -> vector<8x128xf32>
    %45 = arith.addf %43, %44 : vector<8x128xf32>
    %cst_22 = arith.constant 5.000000e-01 : f32
    %46 = vector.broadcast %cst_22 : f32 to vector<8x128xf32>
    %47 = arith.mulf %46, %45 : vector<8x128xf32>
    %48 = math.tanh %47 : vector<8x128xf32>
    %cst_23 = arith.constant 5.000000e-01 : f32
    %49 = vector.broadcast %cst_23 : f32 to vector<8x128xf32>
    %50 = arith.mulf %49, %48 : vector<8x128xf32>
    %cst_24 = arith.constant 5.000000e-01 : f32
    %51 = vector.broadcast %cst_24 : f32 to vector<8x128xf32>
    %52 = arith.addf %50, %51 : vector<8x128xf32>
    %53 = arith.mulf %38, %13 : vector<8x128xf32>
    %54 = arith.mulf %28, %42 : vector<8x128xf32>
    %55 = arith.addf %53, %54 : vector<8x128xf32>
    %56 = math.tanh %55 : vector<8x128xf32>
    %57 = arith.mulf %52, %56 : vector<8x128xf32>
    %c1_i32 = arith.constant 1 : i32
    %58 = arith.truncf %57 : vector<8x128xf32> to vector<8x128xbf16>
    %c8_i32_25 = arith.constant 8 : i32
    %59 = arith.muli %c1_i32, %c8_i32_25 : i32
    %60 = tpu.assume_multiple %59, 8 : i32
    %61 = arith.index_cast %60 : i32 to index
    %c0_26 = arith.constant 0 : index
    %62 = vector.load %arg7[%61, %c0_26] : memref<64x512xf32, #tpu.memory_space<vmem>>, vector<8x512xf32>
    %63 = vector.extract_strided_slice %62 {offsets = [0, 0], sizes = [8, 128], strides = [1, 1]} : vector<8x512xf32> to vector<8x128xf32>
    %cst_27 = arith.constant dense<0.000000e+00> : vector<8x128xf32>
    %64 = tpu.matmul %58, %8, %cst_27 {dimension_numbers = #tpu.dot_dimension_numbers<[1], [0], [0], [1], [0, 0, 1, 1], [], []>} : vector<8x128xbf16>, vector<128x128xbf16>, vector<8x128xf32> -> vector<8x128xf32>
    %65 = arith.addf %63, %64 : vector<8x128xf32>
    %cst_28 = arith.constant 5.000000e-01 : f32
    %66 = vector.broadcast %cst_28 : f32 to vector<8x128xf32>
    %67 = arith.mulf %66, %65 : vector<8x128xf32>
    %68 = math.tanh %67 : vector<8x128xf32>
    %cst_29 = arith.constant 5.000000e-01 : f32
    %69 = vector.broadcast %cst_29 : f32 to vector<8x128xf32>
    %70 = arith.mulf %69, %68 : vector<8x128xf32>
    %cst_30 = arith.constant 5.000000e-01 : f32
    %71 = vector.broadcast %cst_30 : f32 to vector<8x128xf32>
    %72 = arith.addf %70, %71 : vector<8x128xf32>
    %73 = vector.extract_strided_slice %62 {offsets = [0, 128], sizes = [8, 128], strides = [1, 1]} : vector<8x512xf32> to vector<8x128xf32>
    %cst_31 = arith.constant dense<0.000000e+00> : vector<8x128xf32>
    %74 = tpu.matmul %58, %9, %cst_31 {dimension_numbers = #tpu.dot_dimension_numbers<[1], [0], [0], [1], [0, 0, 1, 1], [], []>} : vector<8x128xbf16>, vector<128x128xbf16>, vector<8x128xf32> -> vector<8x128xf32>
    %75 = arith.addf %73, %74 : vector<8x128xf32>
    %cst_32 = arith.constant 5.000000e-01 : f32
    %76 = vector.broadcast %cst_32 : f32 to vector<8x128xf32>
    %77 = arith.mulf %76, %75 : vector<8x128xf32>
    %78 = math.tanh %77 : vector<8x128xf32>
    %cst_33 = arith.constant 5.000000e-01 : f32
    %79 = vector.broadcast %cst_33 : f32 to vector<8x128xf32>
    %80 = arith.mulf %79, %78 : vector<8x128xf32>
    %cst_34 = arith.constant 5.000000e-01 : f32
    %81 = vector.broadcast %cst_34 : f32 to vector<8x128xf32>
    %82 = arith.addf %80, %81 : vector<8x128xf32>
    %83 = vector.extract_strided_slice %62 {offsets = [0, 256], sizes = [8, 128], strides = [1, 1]} : vector<8x512xf32> to vector<8x128xf32>
    %cst_35 = arith.constant dense<0.000000e+00> : vector<8x128xf32>
    %84 = tpu.matmul %58, %10, %cst_35 {dimension_numbers = #tpu.dot_dimension_numbers<[1], [0], [0], [1], [0, 0, 1, 1], [], []>} : vector<8x128xbf16>, vector<128x128xbf16>, vector<8x128xf32> -> vector<8x128xf32>
    %85 = arith.addf %83, %84 : vector<8x128xf32>
    %86 = math.tanh %85 : vector<8x128xf32>
    %87 = vector.extract_strided_slice %62 {offsets = [0, 384], sizes = [8, 128], strides = [1, 1]} : vector<8x512xf32> to vector<8x128xf32>
    %cst_36 = arith.constant dense<0.000000e+00> : vector<8x128xf32>
    %88 = tpu.matmul %58, %11, %cst_36 {dimension_numbers = #tpu.dot_dimension_numbers<[1], [0], [0], [1], [0, 0, 1, 1], [], []>} : vector<8x128xbf16>, vector<128x128xbf16>, vector<8x128xf32> -> vector<8x128xf32>
    %89 = arith.addf %87, %88 : vector<8x128xf32>
    %cst_37 = arith.constant 5.000000e-01 : f32
    %90 = vector.broadcast %cst_37 : f32 to vector<8x128xf32>
    %91 = arith.mulf %90, %89 : vector<8x128xf32>
    %92 = math.tanh %91 : vector<8x128xf32>
    %cst_38 = arith.constant 5.000000e-01 : f32
    %93 = vector.broadcast %cst_38 : f32 to vector<8x128xf32>
    %94 = arith.mulf %93, %92 : vector<8x128xf32>
    %cst_39 = arith.constant 5.000000e-01 : f32
    %95 = vector.broadcast %cst_39 : f32 to vector<8x128xf32>
    %96 = arith.addf %94, %95 : vector<8x128xf32>
    %97 = arith.mulf %82, %55 : vector<8x128xf32>
    %98 = arith.mulf %72, %86 : vector<8x128xf32>
    %99 = arith.addf %97, %98 : vector<8x128xf32>
    %100 = math.tanh %99 : vector<8x128xf32>
    %101 = arith.mulf %96, %100 : vector<8x128xf32>
    %c2_i32 = arith.constant 2 : i32
    %102 = arith.truncf %101 : vector<8x128xf32> to vector<8x128xbf16>
    %c8_i32_40 = arith.constant 8 : i32
    %103 = arith.muli %c2_i32, %c8_i32_40 : i32
    %104 = tpu.assume_multiple %103, 8 : i32
    %105 = arith.index_cast %104 : i32 to index
    %c0_41 = arith.constant 0 : index
    %106 = vector.load %arg7[%105, %c0_41] : memref<64x512xf32, #tpu.memory_space<vmem>>, vector<8x512xf32>
    %107 = vector.extract_strided_slice %106 {offsets = [0, 0], sizes = [8, 128], strides = [1, 1]} : vector<8x512xf32> to vector<8x128xf32>
    %cst_42 = arith.constant dense<0.000000e+00> : vector<8x128xf32>
    %108 = tpu.matmul %102, %8, %cst_42 {dimension_numbers = #tpu.dot_dimension_numbers<[1], [0], [0], [1], [0, 0, 1, 1], [], []>} : vector<8x128xbf16>, vector<128x128xbf16>, vector<8x128xf32> -> vector<8x128xf32>
    %109 = arith.addf %107, %108 : vector<8x128xf32>
    %cst_43 = arith.constant 5.000000e-01 : f32
    %110 = vector.broadcast %cst_43 : f32 to vector<8x128xf32>
    %111 = arith.mulf %110, %109 : vector<8x128xf32>
    %112 = math.tanh %111 : vector<8x128xf32>
    %cst_44 = arith.constant 5.000000e-01 : f32
    %113 = vector.broadcast %cst_44 : f32 to vector<8x128xf32>
    %114 = arith.mulf %113, %112 : vector<8x128xf32>
    %cst_45 = arith.constant 5.000000e-01 : f32
    %115 = vector.broadcast %cst_45 : f32 to vector<8x128xf32>
    %116 = arith.addf %114, %115 : vector<8x128xf32>
    %117 = vector.extract_strided_slice %106 {offsets = [0, 128], sizes = [8, 128], strides = [1, 1]} : vector<8x512xf32> to vector<8x128xf32>
    %cst_46 = arith.constant dense<0.000000e+00> : vector<8x128xf32>
    %118 = tpu.matmul %102, %9, %cst_46 {dimension_numbers = #tpu.dot_dimension_numbers<[1], [0], [0], [1], [0, 0, 1, 1], [], []>} : vector<8x128xbf16>, vector<128x128xbf16>, vector<8x128xf32> -> vector<8x128xf32>
    %119 = arith.addf %117, %118 : vector<8x128xf32>
    %cst_47 = arith.constant 5.000000e-01 : f32
    %120 = vector.broadcast %cst_47 : f32 to vector<8x128xf32>
    %121 = arith.mulf %120, %119 : vector<8x128xf32>
    %122 = math.tanh %121 : vector<8x128xf32>
    %cst_48 = arith.constant 5.000000e-01 : f32
    %123 = vector.broadcast %cst_48 : f32 to vector<8x128xf32>
    %124 = arith.mulf %123, %122 : vector<8x128xf32>
    %cst_49 = arith.constant 5.000000e-01 : f32
    %125 = vector.broadcast %cst_49 : f32 to vector<8x128xf32>
    %126 = arith.addf %124, %125 : vector<8x128xf32>
    %127 = vector.extract_strided_slice %106 {offsets = [0, 256], sizes = [8, 128], strides = [1, 1]} : vector<8x512xf32> to vector<8x128xf32>
    %cst_50 = arith.constant dense<0.000000e+00> : vector<8x128xf32>
    %128 = tpu.matmul %102, %10, %cst_50 {dimension_numbers = #tpu.dot_dimension_numbers<[1], [0], [0], [1], [0, 0, 1, 1], [], []>} : vector<8x128xbf16>, vector<128x128xbf16>, vector<8x128xf32> -> vector<8x128xf32>
    %129 = arith.addf %127, %128 : vector<8x128xf32>
    %130 = math.tanh %129 : vector<8x128xf32>
    %131 = vector.extract_strided_slice %106 {offsets = [0, 384], sizes = [8, 128], strides = [1, 1]} : vector<8x512xf32> to vector<8x128xf32>
    %cst_51 = arith.constant dense<0.000000e+00> : vector<8x128xf32>
    %132 = tpu.matmul %102, %11, %cst_51 {dimension_numbers = #tpu.dot_dimension_numbers<[1], [0], [0], [1], [0, 0, 1, 1], [], []>} : vector<8x128xbf16>, vector<128x128xbf16>, vector<8x128xf32> -> vector<8x128xf32>
    %133 = arith.addf %131, %132 : vector<8x128xf32>
    %cst_52 = arith.constant 5.000000e-01 : f32
    %134 = vector.broadcast %cst_52 : f32 to vector<8x128xf32>
    %135 = arith.mulf %134, %133 : vector<8x128xf32>
    %136 = math.tanh %135 : vector<8x128xf32>
    %cst_53 = arith.constant 5.000000e-01 : f32
    %137 = vector.broadcast %cst_53 : f32 to vector<8x128xf32>
    %138 = arith.mulf %137, %136 : vector<8x128xf32>
    %cst_54 = arith.constant 5.000000e-01 : f32
    %139 = vector.broadcast %cst_54 : f32 to vector<8x128xf32>
    %140 = arith.addf %138, %139 : vector<8x128xf32>
    %141 = arith.mulf %126, %99 : vector<8x128xf32>
    %142 = arith.mulf %116, %130 : vector<8x128xf32>
    %143 = arith.addf %141, %142 : vector<8x128xf32>
    %144 = math.tanh %143 : vector<8x128xf32>
    %145 = arith.mulf %140, %144 : vector<8x128xf32>
    %c3_i32 = arith.constant 3 : i32
    %146 = arith.truncf %145 : vector<8x128xf32> to vector<8x128xbf16>
    %c8_i32_55 = arith.constant 8 : i32
    %147 = arith.muli %c3_i32, %c8_i32_55 : i32
    %148 = tpu.assume_multiple %147, 8 : i32
    %149 = arith.index_cast %148 : i32 to index
    %c0_56 = arith.constant 0 : index
    %150 = vector.load %arg7[%149, %c0_56] : memref<64x512xf32, #tpu.memory_space<vmem>>, vector<8x512xf32>
    %151 = vector.extract_strided_slice %150 {offsets = [0, 0], sizes = [8, 128], strides = [1, 1]} : vector<8x512xf32> to vector<8x128xf32>
    %cst_57 = arith.constant dense<0.000000e+00> : vector<8x128xf32>
    %152 = tpu.matmul %146, %8, %cst_57 {dimension_numbers = #tpu.dot_dimension_numbers<[1], [0], [0], [1], [0, 0, 1, 1], [], []>} : vector<8x128xbf16>, vector<128x128xbf16>, vector<8x128xf32> -> vector<8x128xf32>
    %153 = arith.addf %151, %152 : vector<8x128xf32>
    %cst_58 = arith.constant 5.000000e-01 : f32
    %154 = vector.broadcast %cst_58 : f32 to vector<8x128xf32>
    %155 = arith.mulf %154, %153 : vector<8x128xf32>
    %156 = math.tanh %155 : vector<8x128xf32>
    %cst_59 = arith.constant 5.000000e-01 : f32
    %157 = vector.broadcast %cst_59 : f32 to vector<8x128xf32>
    %158 = arith.mulf %157, %156 : vector<8x128xf32>
    %cst_60 = arith.constant 5.000000e-01 : f32
    %159 = vector.broadcast %cst_60 : f32 to vector<8x128xf32>
    %160 = arith.addf %158, %159 : vector<8x128xf32>
    %161 = vector.extract_strided_slice %150 {offsets = [0, 128], sizes = [8, 128], strides = [1, 1]} : vector<8x512xf32> to vector<8x128xf32>
    %cst_61 = arith.constant dense<0.000000e+00> : vector<8x128xf32>
    %162 = tpu.matmul %146, %9, %cst_61 {dimension_numbers = #tpu.dot_dimension_numbers<[1], [0], [0], [1], [0, 0, 1, 1], [], []>} : vector<8x128xbf16>, vector<128x128xbf16>, vector<8x128xf32> -> vector<8x128xf32>
    %163 = arith.addf %161, %162 : vector<8x128xf32>
    %cst_62 = arith.constant 5.000000e-01 : f32
    %164 = vector.broadcast %cst_62 : f32 to vector<8x128xf32>
    %165 = arith.mulf %164, %163 : vector<8x128xf32>
    %166 = math.tanh %165 : vector<8x128xf32>
    %cst_63 = arith.constant 5.000000e-01 : f32
    %167 = vector.broadcast %cst_63 : f32 to vector<8x128xf32>
    %168 = arith.mulf %167, %166 : vector<8x128xf32>
    %cst_64 = arith.constant 5.000000e-01 : f32
    %169 = vector.broadcast %cst_64 : f32 to vector<8x128xf32>
    %170 = arith.addf %168, %169 : vector<8x128xf32>
    %171 = vector.extract_strided_slice %150 {offsets = [0, 256], sizes = [8, 128], strides = [1, 1]} : vector<8x512xf32> to vector<8x128xf32>
    %cst_65 = arith.constant dense<0.000000e+00> : vector<8x128xf32>
    %172 = tpu.matmul %146, %10, %cst_65 {dimension_numbers = #tpu.dot_dimension_numbers<[1], [0], [0], [1], [0, 0, 1, 1], [], []>} : vector<8x128xbf16>, vector<128x128xbf16>, vector<8x128xf32> -> vector<8x128xf32>
    %173 = arith.addf %171, %172 : vector<8x128xf32>
    %174 = math.tanh %173 : vector<8x128xf32>
    %175 = vector.extract_strided_slice %150 {offsets = [0, 384], sizes = [8, 128], strides = [1, 1]} : vector<8x512xf32> to vector<8x128xf32>
    %cst_66 = arith.constant dense<0.000000e+00> : vector<8x128xf32>
    %176 = tpu.matmul %146, %11, %cst_66 {dimension_numbers = #tpu.dot_dimension_numbers<[1], [0], [0], [1], [0, 0, 1, 1], [], []>} : vector<8x128xbf16>, vector<128x128xbf16>, vector<8x128xf32> -> vector<8x128xf32>
    %177 = arith.addf %175, %176 : vector<8x128xf32>
    %cst_67 = arith.constant 5.000000e-01 : f32
    %178 = vector.broadcast %cst_67 : f32 to vector<8x128xf32>
    %179 = arith.mulf %178, %177 : vector<8x128xf32>
    %180 = math.tanh %179 : vector<8x128xf32>
    %cst_68 = arith.constant 5.000000e-01 : f32
    %181 = vector.broadcast %cst_68 : f32 to vector<8x128xf32>
    %182 = arith.mulf %181, %180 : vector<8x128xf32>
    %cst_69 = arith.constant 5.000000e-01 : f32
    %183 = vector.broadcast %cst_69 : f32 to vector<8x128xf32>
    %184 = arith.addf %182, %183 : vector<8x128xf32>
    %185 = arith.mulf %170, %143 : vector<8x128xf32>
    %186 = arith.mulf %160, %174 : vector<8x128xf32>
    %187 = arith.addf %185, %186 : vector<8x128xf32>
    %188 = math.tanh %187 : vector<8x128xf32>
    %189 = arith.mulf %184, %188 : vector<8x128xf32>
    %c4_i32 = arith.constant 4 : i32
    %190 = arith.truncf %189 : vector<8x128xf32> to vector<8x128xbf16>
    %c8_i32_70 = arith.constant 8 : i32
    %191 = arith.muli %c4_i32, %c8_i32_70 : i32
    %192 = tpu.assume_multiple %191, 8 : i32
    %193 = arith.index_cast %192 : i32 to index
    %c0_71 = arith.constant 0 : index
    %194 = vector.load %arg7[%193, %c0_71] : memref<64x512xf32, #tpu.memory_space<vmem>>, vector<8x512xf32>
    %195 = vector.extract_strided_slice %194 {offsets = [0, 0], sizes = [8, 128], strides = [1, 1]} : vector<8x512xf32> to vector<8x128xf32>
    %cst_72 = arith.constant dense<0.000000e+00> : vector<8x128xf32>
    %196 = tpu.matmul %190, %8, %cst_72 {dimension_numbers = #tpu.dot_dimension_numbers<[1], [0], [0], [1], [0, 0, 1, 1], [], []>} : vector<8x128xbf16>, vector<128x128xbf16>, vector<8x128xf32> -> vector<8x128xf32>
    %197 = arith.addf %195, %196 : vector<8x128xf32>
    %cst_73 = arith.constant 5.000000e-01 : f32
    %198 = vector.broadcast %cst_73 : f32 to vector<8x128xf32>
    %199 = arith.mulf %198, %197 : vector<8x128xf32>
    %200 = math.tanh %199 : vector<8x128xf32>
    %cst_74 = arith.constant 5.000000e-01 : f32
    %201 = vector.broadcast %cst_74 : f32 to vector<8x128xf32>
    %202 = arith.mulf %201, %200 : vector<8x128xf32>
    %cst_75 = arith.constant 5.000000e-01 : f32
    %203 = vector.broadcast %cst_75 : f32 to vector<8x128xf32>
    %204 = arith.addf %202, %203 : vector<8x128xf32>
    %205 = vector.extract_strided_slice %194 {offsets = [0, 128], sizes = [8, 128], strides = [1, 1]} : vector<8x512xf32> to vector<8x128xf32>
    %cst_76 = arith.constant dense<0.000000e+00> : vector<8x128xf32>
    %206 = tpu.matmul %190, %9, %cst_76 {dimension_numbers = #tpu.dot_dimension_numbers<[1], [0], [0], [1], [0, 0, 1, 1], [], []>} : vector<8x128xbf16>, vector<128x128xbf16>, vector<8x128xf32> -> vector<8x128xf32>
    %207 = arith.addf %205, %206 : vector<8x128xf32>
    %cst_77 = arith.constant 5.000000e-01 : f32
    %208 = vector.broadcast %cst_77 : f32 to vector<8x128xf32>
    %209 = arith.mulf %208, %207 : vector<8x128xf32>
    %210 = math.tanh %209 : vector<8x128xf32>
    %cst_78 = arith.constant 5.000000e-01 : f32
    %211 = vector.broadcast %cst_78 : f32 to vector<8x128xf32>
    %212 = arith.mulf %211, %210 : vector<8x128xf32>
    %cst_79 = arith.constant 5.000000e-01 : f32
    %213 = vector.broadcast %cst_79 : f32 to vector<8x128xf32>
    %214 = arith.addf %212, %213 : vector<8x128xf32>
    %215 = vector.extract_strided_slice %194 {offsets = [0, 256], sizes = [8, 128], strides = [1, 1]} : vector<8x512xf32> to vector<8x128xf32>
    %cst_80 = arith.constant dense<0.000000e+00> : vector<8x128xf32>
    %216 = tpu.matmul %190, %10, %cst_80 {dimension_numbers = #tpu.dot_dimension_numbers<[1], [0], [0], [1], [0, 0, 1, 1], [], []>} : vector<8x128xbf16>, vector<128x128xbf16>, vector<8x128xf32> -> vector<8x128xf32>
    %217 = arith.addf %215, %216 : vector<8x128xf32>
    %218 = math.tanh %217 : vector<8x128xf32>
    %219 = vector.extract_strided_slice %194 {offsets = [0, 384], sizes = [8, 128], strides = [1, 1]} : vector<8x512xf32> to vector<8x128xf32>
    %cst_81 = arith.constant dense<0.000000e+00> : vector<8x128xf32>
    %220 = tpu.matmul %190, %11, %cst_81 {dimension_numbers = #tpu.dot_dimension_numbers<[1], [0], [0], [1], [0, 0, 1, 1], [], []>} : vector<8x128xbf16>, vector<128x128xbf16>, vector<8x128xf32> -> vector<8x128xf32>
    %221 = arith.addf %219, %220 : vector<8x128xf32>
    %cst_82 = arith.constant 5.000000e-01 : f32
    %222 = vector.broadcast %cst_82 : f32 to vector<8x128xf32>
    %223 = arith.mulf %222, %221 : vector<8x128xf32>
    %224 = math.tanh %223 : vector<8x128xf32>
    %cst_83 = arith.constant 5.000000e-01 : f32
    %225 = vector.broadcast %cst_83 : f32 to vector<8x128xf32>
    %226 = arith.mulf %225, %224 : vector<8x128xf32>
    %cst_84 = arith.constant 5.000000e-01 : f32
    %227 = vector.broadcast %cst_84 : f32 to vector<8x128xf32>
    %228 = arith.addf %226, %227 : vector<8x128xf32>
    %229 = arith.mulf %214, %187 : vector<8x128xf32>
    %230 = arith.mulf %204, %218 : vector<8x128xf32>
    %231 = arith.addf %229, %230 : vector<8x128xf32>
    %232 = math.tanh %231 : vector<8x128xf32>
    %233 = arith.mulf %228, %232 : vector<8x128xf32>
    %c5_i32 = arith.constant 5 : i32
    %234 = arith.truncf %233 : vector<8x128xf32> to vector<8x128xbf16>
    %c8_i32_85 = arith.constant 8 : i32
    %235 = arith.muli %c5_i32, %c8_i32_85 : i32
    %236 = tpu.assume_multiple %235, 8 : i32
    %237 = arith.index_cast %236 : i32 to index
    %c0_86 = arith.constant 0 : index
    %238 = vector.load %arg7[%237, %c0_86] : memref<64x512xf32, #tpu.memory_space<vmem>>, vector<8x512xf32>
    %239 = vector.extract_strided_slice %238 {offsets = [0, 0], sizes = [8, 128], strides = [1, 1]} : vector<8x512xf32> to vector<8x128xf32>
    %cst_87 = arith.constant dense<0.000000e+00> : vector<8x128xf32>
    %240 = tpu.matmul %234, %8, %cst_87 {dimension_numbers = #tpu.dot_dimension_numbers<[1], [0], [0], [1], [0, 0, 1, 1], [], []>} : vector<8x128xbf16>, vector<128x128xbf16>, vector<8x128xf32> -> vector<8x128xf32>
    %241 = arith.addf %239, %240 : vector<8x128xf32>
    %cst_88 = arith.constant 5.000000e-01 : f32
    %242 = vector.broadcast %cst_88 : f32 to vector<8x128xf32>
    %243 = arith.mulf %242, %241 : vector<8x128xf32>
    %244 = math.tanh %243 : vector<8x128xf32>
    %cst_89 = arith.constant 5.000000e-01 : f32
    %245 = vector.broadcast %cst_89 : f32 to vector<8x128xf32>
    %246 = arith.mulf %245, %244 : vector<8x128xf32>
    %cst_90 = arith.constant 5.000000e-01 : f32
    %247 = vector.broadcast %cst_90 : f32 to vector<8x128xf32>
    %248 = arith.addf %246, %247 : vector<8x128xf32>
    %249 = vector.extract_strided_slice %238 {offsets = [0, 128], sizes = [8, 128], strides = [1, 1]} : vector<8x512xf32> to vector<8x128xf32>
    %cst_91 = arith.constant dense<0.000000e+00> : vector<8x128xf32>
    %250 = tpu.matmul %234, %9, %cst_91 {dimension_numbers = #tpu.dot_dimension_numbers<[1], [0], [0], [1], [0, 0, 1, 1], [], []>} : vector<8x128xbf16>, vector<128x128xbf16>, vector<8x128xf32> -> vector<8x128xf32>
    %251 = arith.addf %249, %250 : vector<8x128xf32>
    %cst_92 = arith.constant 5.000000e-01 : f32
    %252 = vector.broadcast %cst_92 : f32 to vector<8x128xf32>
    %253 = arith.mulf %252, %251 : vector<8x128xf32>
    %254 = math.tanh %253 : vector<8x128xf32>
    %cst_93 = arith.constant 5.000000e-01 : f32
    %255 = vector.broadcast %cst_93 : f32 to vector<8x128xf32>
    %256 = arith.mulf %255, %254 : vector<8x128xf32>
    %cst_94 = arith.constant 5.000000e-01 : f32
    %257 = vector.broadcast %cst_94 : f32 to vector<8x128xf32>
    %258 = arith.addf %256, %257 : vector<8x128xf32>
    %259 = vector.extract_strided_slice %238 {offsets = [0, 256], sizes = [8, 128], strides = [1, 1]} : vector<8x512xf32> to vector<8x128xf32>
    %cst_95 = arith.constant dense<0.000000e+00> : vector<8x128xf32>
    %260 = tpu.matmul %234, %10, %cst_95 {dimension_numbers = #tpu.dot_dimension_numbers<[1], [0], [0], [1], [0, 0, 1, 1], [], []>} : vector<8x128xbf16>, vector<128x128xbf16>, vector<8x128xf32> -> vector<8x128xf32>
    %261 = arith.addf %259, %260 : vector<8x128xf32>
    %262 = math.tanh %261 : vector<8x128xf32>
    %263 = vector.extract_strided_slice %238 {offsets = [0, 384], sizes = [8, 128], strides = [1, 1]} : vector<8x512xf32> to vector<8x128xf32>
    %cst_96 = arith.constant dense<0.000000e+00> : vector<8x128xf32>
    %264 = tpu.matmul %234, %11, %cst_96 {dimension_numbers = #tpu.dot_dimension_numbers<[1], [0], [0], [1], [0, 0, 1, 1], [], []>} : vector<8x128xbf16>, vector<128x128xbf16>, vector<8x128xf32> -> vector<8x128xf32>
    %265 = arith.addf %263, %264 : vector<8x128xf32>
    %cst_97 = arith.constant 5.000000e-01 : f32
    %266 = vector.broadcast %cst_97 : f32 to vector<8x128xf32>
    %267 = arith.mulf %266, %265 : vector<8x128xf32>
    %268 = math.tanh %267 : vector<8x128xf32>
    %cst_98 = arith.constant 5.000000e-01 : f32
    %269 = vector.broadcast %cst_98 : f32 to vector<8x128xf32>
    %270 = arith.mulf %269, %268 : vector<8x128xf32>
    %cst_99 = arith.constant 5.000000e-01 : f32
    %271 = vector.broadcast %cst_99 : f32 to vector<8x128xf32>
    %272 = arith.addf %270, %271 : vector<8x128xf32>
    %273 = arith.mulf %258, %231 : vector<8x128xf32>
    %274 = arith.mulf %248, %262 : vector<8x128xf32>
    %275 = arith.addf %273, %274 : vector<8x128xf32>
    %276 = math.tanh %275 : vector<8x128xf32>
    %277 = arith.mulf %272, %276 : vector<8x128xf32>
    %c6_i32 = arith.constant 6 : i32
    %278 = arith.truncf %277 : vector<8x128xf32> to vector<8x128xbf16>
    %c8_i32_100 = arith.constant 8 : i32
    %279 = arith.muli %c6_i32, %c8_i32_100 : i32
    %280 = tpu.assume_multiple %279, 8 : i32
    %281 = arith.index_cast %280 : i32 to index
    %c0_101 = arith.constant 0 : index
    %282 = vector.load %arg7[%281, %c0_101] : memref<64x512xf32, #tpu.memory_space<vmem>>, vector<8x512xf32>
    %283 = vector.extract_strided_slice %282 {offsets = [0, 0], sizes = [8, 128], strides = [1, 1]} : vector<8x512xf32> to vector<8x128xf32>
    %cst_102 = arith.constant dense<0.000000e+00> : vector<8x128xf32>
    %284 = tpu.matmul %278, %8, %cst_102 {dimension_numbers = #tpu.dot_dimension_numbers<[1], [0], [0], [1], [0, 0, 1, 1], [], []>} : vector<8x128xbf16>, vector<128x128xbf16>, vector<8x128xf32> -> vector<8x128xf32>
    %285 = arith.addf %283, %284 : vector<8x128xf32>
    %cst_103 = arith.constant 5.000000e-01 : f32
    %286 = vector.broadcast %cst_103 : f32 to vector<8x128xf32>
    %287 = arith.mulf %286, %285 : vector<8x128xf32>
    %288 = math.tanh %287 : vector<8x128xf32>
    %cst_104 = arith.constant 5.000000e-01 : f32
    %289 = vector.broadcast %cst_104 : f32 to vector<8x128xf32>
    %290 = arith.mulf %289, %288 : vector<8x128xf32>
    %cst_105 = arith.constant 5.000000e-01 : f32
    %291 = vector.broadcast %cst_105 : f32 to vector<8x128xf32>
    %292 = arith.addf %290, %291 : vector<8x128xf32>
    %293 = vector.extract_strided_slice %282 {offsets = [0, 128], sizes = [8, 128], strides = [1, 1]} : vector<8x512xf32> to vector<8x128xf32>
    %cst_106 = arith.constant dense<0.000000e+00> : vector<8x128xf32>
    %294 = tpu.matmul %278, %9, %cst_106 {dimension_numbers = #tpu.dot_dimension_numbers<[1], [0], [0], [1], [0, 0, 1, 1], [], []>} : vector<8x128xbf16>, vector<128x128xbf16>, vector<8x128xf32> -> vector<8x128xf32>
    %295 = arith.addf %293, %294 : vector<8x128xf32>
    %cst_107 = arith.constant 5.000000e-01 : f32
    %296 = vector.broadcast %cst_107 : f32 to vector<8x128xf32>
    %297 = arith.mulf %296, %295 : vector<8x128xf32>
    %298 = math.tanh %297 : vector<8x128xf32>
    %cst_108 = arith.constant 5.000000e-01 : f32
    %299 = vector.broadcast %cst_108 : f32 to vector<8x128xf32>
    %300 = arith.mulf %299, %298 : vector<8x128xf32>
    %cst_109 = arith.constant 5.000000e-01 : f32
    %301 = vector.broadcast %cst_109 : f32 to vector<8x128xf32>
    %302 = arith.addf %300, %301 : vector<8x128xf32>
    %303 = vector.extract_strided_slice %282 {offsets = [0, 256], sizes = [8, 128], strides = [1, 1]} : vector<8x512xf32> to vector<8x128xf32>
    %cst_110 = arith.constant dense<0.000000e+00> : vector<8x128xf32>
    %304 = tpu.matmul %278, %10, %cst_110 {dimension_numbers = #tpu.dot_dimension_numbers<[1], [0], [0], [1], [0, 0, 1, 1], [], []>} : vector<8x128xbf16>, vector<128x128xbf16>, vector<8x128xf32> -> vector<8x128xf32>
    %305 = arith.addf %303, %304 : vector<8x128xf32>
    %306 = math.tanh %305 : vector<8x128xf32>
    %307 = vector.extract_strided_slice %282 {offsets = [0, 384], sizes = [8, 128], strides = [1, 1]} : vector<8x512xf32> to vector<8x128xf32>
    %cst_111 = arith.constant dense<0.000000e+00> : vector<8x128xf32>
    %308 = tpu.matmul %278, %11, %cst_111 {dimension_numbers = #tpu.dot_dimension_numbers<[1], [0], [0], [1], [0, 0, 1, 1], [], []>} : vector<8x128xbf16>, vector<128x128xbf16>, vector<8x128xf32> -> vector<8x128xf32>
    %309 = arith.addf %307, %308 : vector<8x128xf32>
    %cst_112 = arith.constant 5.000000e-01 : f32
    %310 = vector.broadcast %cst_112 : f32 to vector<8x128xf32>
    %311 = arith.mulf %310, %309 : vector<8x128xf32>
    %312 = math.tanh %311 : vector<8x128xf32>
    %cst_113 = arith.constant 5.000000e-01 : f32
    %313 = vector.broadcast %cst_113 : f32 to vector<8x128xf32>
    %314 = arith.mulf %313, %312 : vector<8x128xf32>
    %cst_114 = arith.constant 5.000000e-01 : f32
    %315 = vector.broadcast %cst_114 : f32 to vector<8x128xf32>
    %316 = arith.addf %314, %315 : vector<8x128xf32>
    %317 = arith.mulf %302, %275 : vector<8x128xf32>
    %318 = arith.mulf %292, %306 : vector<8x128xf32>
    %319 = arith.addf %317, %318 : vector<8x128xf32>
    %320 = math.tanh %319 : vector<8x128xf32>
    %321 = arith.mulf %316, %320 : vector<8x128xf32>
    %c7_i32 = arith.constant 7 : i32
    %322 = arith.truncf %321 : vector<8x128xf32> to vector<8x128xbf16>
    %c8_i32_115 = arith.constant 8 : i32
    %323 = arith.muli %c7_i32, %c8_i32_115 : i32
    %324 = tpu.assume_multiple %323, 8 : i32
    %325 = arith.index_cast %324 : i32 to index
    %c0_116 = arith.constant 0 : index
    %326 = vector.load %arg7[%325, %c0_116] : memref<64x512xf32, #tpu.memory_space<vmem>>, vector<8x512xf32>
    %327 = vector.extract_strided_slice %326 {offsets = [0, 0], sizes = [8, 128], strides = [1, 1]} : vector<8x512xf32> to vector<8x128xf32>
    %cst_117 = arith.constant dense<0.000000e+00> : vector<8x128xf32>
    %328 = tpu.matmul %322, %8, %cst_117 {dimension_numbers = #tpu.dot_dimension_numbers<[1], [0], [0], [1], [0, 0, 1, 1], [], []>} : vector<8x128xbf16>, vector<128x128xbf16>, vector<8x128xf32> -> vector<8x128xf32>
    %329 = arith.addf %327, %328 : vector<8x128xf32>
    %cst_118 = arith.constant 5.000000e-01 : f32
    %330 = vector.broadcast %cst_118 : f32 to vector<8x128xf32>
    %331 = arith.mulf %330, %329 : vector<8x128xf32>
    %332 = math.tanh %331 : vector<8x128xf32>
    %cst_119 = arith.constant 5.000000e-01 : f32
    %333 = vector.broadcast %cst_119 : f32 to vector<8x128xf32>
    %334 = arith.mulf %333, %332 : vector<8x128xf32>
    %cst_120 = arith.constant 5.000000e-01 : f32
    %335 = vector.broadcast %cst_120 : f32 to vector<8x128xf32>
    %336 = arith.addf %334, %335 : vector<8x128xf32>
    %337 = vector.extract_strided_slice %326 {offsets = [0, 128], sizes = [8, 128], strides = [1, 1]} : vector<8x512xf32> to vector<8x128xf32>
    %cst_121 = arith.constant dense<0.000000e+00> : vector<8x128xf32>
    %338 = tpu.matmul %322, %9, %cst_121 {dimension_numbers = #tpu.dot_dimension_numbers<[1], [0], [0], [1], [0, 0, 1, 1], [], []>} : vector<8x128xbf16>, vector<128x128xbf16>, vector<8x128xf32> -> vector<8x128xf32>
    %339 = arith.addf %337, %338 : vector<8x128xf32>
    %cst_122 = arith.constant 5.000000e-01 : f32
    %340 = vector.broadcast %cst_122 : f32 to vector<8x128xf32>
    %341 = arith.mulf %340, %339 : vector<8x128xf32>
    %342 = math.tanh %341 : vector<8x128xf32>
    %cst_123 = arith.constant 5.000000e-01 : f32
    %343 = vector.broadcast %cst_123 : f32 to vector<8x128xf32>
    %344 = arith.mulf %343, %342 : vector<8x128xf32>
    %cst_124 = arith.constant 5.000000e-01 : f32
    %345 = vector.broadcast %cst_124 : f32 to vector<8x128xf32>
    %346 = arith.addf %344, %345 : vector<8x128xf32>
    %347 = vector.extract_strided_slice %326 {offsets = [0, 256], sizes = [8, 128], strides = [1, 1]} : vector<8x512xf32> to vector<8x128xf32>
    %cst_125 = arith.constant dense<0.000000e+00> : vector<8x128xf32>
    %348 = tpu.matmul %322, %10, %cst_125 {dimension_numbers = #tpu.dot_dimension_numbers<[1], [0], [0], [1], [0, 0, 1, 1], [], []>} : vector<8x128xbf16>, vector<128x128xbf16>, vector<8x128xf32> -> vector<8x128xf32>
    %349 = arith.addf %347, %348 : vector<8x128xf32>
    %350 = math.tanh %349 : vector<8x128xf32>
    %351 = vector.extract_strided_slice %326 {offsets = [0, 384], sizes = [8, 128], strides = [1, 1]} : vector<8x512xf32> to vector<8x128xf32>
    %cst_126 = arith.constant dense<0.000000e+00> : vector<8x128xf32>
    %352 = tpu.matmul %322, %11, %cst_126 {dimension_numbers = #tpu.dot_dimension_numbers<[1], [0], [0], [1], [0, 0, 1, 1], [], []>} : vector<8x128xbf16>, vector<128x128xbf16>, vector<8x128xf32> -> vector<8x128xf32>
    %353 = arith.addf %351, %352 : vector<8x128xf32>
    %cst_127 = arith.constant 5.000000e-01 : f32
    %354 = vector.broadcast %cst_127 : f32 to vector<8x128xf32>
    %355 = arith.mulf %354, %353 : vector<8x128xf32>
    %356 = math.tanh %355 : vector<8x128xf32>
    %cst_128 = arith.constant 5.000000e-01 : f32
    %357 = vector.broadcast %cst_128 : f32 to vector<8x128xf32>
    %358 = arith.mulf %357, %356 : vector<8x128xf32>
    %cst_129 = arith.constant 5.000000e-01 : f32
    %359 = vector.broadcast %cst_129 : f32 to vector<8x128xf32>
    %360 = arith.addf %358, %359 : vector<8x128xf32>
    %361 = arith.mulf %346, %319 : vector<8x128xf32>
    %362 = arith.mulf %336, %350 : vector<8x128xf32>
    %363 = arith.addf %361, %362 : vector<8x128xf32>
    %364 = math.tanh %363 : vector<8x128xf32>
    %365 = arith.mulf %360, %364 : vector<8x128xf32>
    %c8_i32_130 = arith.constant 8 : i32
    %366 = arith.truncf %365 : vector<8x128xf32> to vector<8x128xbf16>
    %c0_131 = arith.constant 0 : index
    %c0_132 = arith.constant 0 : index
    %367 = vector.load %arg4[%c0_131, %c0_132] : memref<128x128xbf16, #tpu.memory_space<vmem>>, vector<128x128xbf16>
    %cst_133 = arith.constant dense<0.000000e+00> : vector<8x128xf32>
    %368 = tpu.matmul %366, %367, %cst_133 {dimension_numbers = #tpu.dot_dimension_numbers<[1], [0], [0], [1], [0, 0, 1, 1], [], []>} : vector<8x128xbf16>, vector<128x128xbf16>, vector<8x128xf32> -> vector<8x128xf32>
    %c0_134 = arith.constant 0 : index
    %c0_135 = arith.constant 0 : index
    %369 = vector.load %arg5[%c0_134, %c0_135] : memref<1x128xf32, #tpu.memory_space<vmem>>, vector<1x128xf32>
    %370 = vector.broadcast %369 : vector<1x128xf32> to vector<8x128xf32>
    %371 = arith.addf %368, %370 : vector<8x128xf32>
    %cst_136 = arith.constant 5.000000e-01 : f32
    %372 = vector.broadcast %cst_136 : f32 to vector<8x128xf32>
    %373 = arith.mulf %372, %371 : vector<8x128xf32>
    %374 = math.tanh %373 : vector<8x128xf32>
    %cst_137 = arith.constant 5.000000e-01 : f32
    %375 = vector.broadcast %cst_137 : f32 to vector<8x128xf32>
    %376 = arith.mulf %375, %374 : vector<8x128xf32>
    %cst_138 = arith.constant 5.000000e-01 : f32
    %377 = vector.broadcast %cst_138 : f32 to vector<8x128xf32>
    %378 = arith.addf %376, %377 : vector<8x128xf32>
    %c0_139 = arith.constant 0 : index
    %c0_140 = arith.constant 0 : index
    %379 = vector.load %arg6[%c0_139, %c0_140] : memref<8x128xf32, #tpu.memory_space<vmem>>, vector<8x128xf32>
    tpu.vector_store %arg6[%c0_139, %c0_140], %378 {strides = array<i32>} : memref<8x128xf32, #tpu.memory_space<vmem>>, vector<8x128xf32>,
    return
  }
}

</mosaic_0001>

<llo_original>
// kernel: lstm_seq2one.1
$region0: #{lstm_seq2one.1}
  #allocation0 [shape = 'u32[]', space=smem, size = 0x4, offset = 0x4, fixed_abs, tag = 'smem constant byte address 0x4 - core index']
  #allocation1 [shape = 'u32[144,128]{1,0:T(1,128)}', space=vmem, size = 0x12000, scoped, tag = 'internal scratch']
  #allocation2 [shape = 'f32[64,512]{1,0:T(8,128)}', space=vmem, size = 0x20000, scoped, tag = 'scratch operand']
  %s0 = inlined_call_operand.vmem [shape: bf16[64,128], index: 0, kind: input, shape index: {}]
  %s1 = inlined_call_operand.hbm [shape: bf16[128,512], index: 1, kind: input, shape index: {}]
  %s2 = inlined_call_operand.hbm [shape: bf16[128,512], index: 2, kind: input, shape index: {}]
  %s3 = inlined_call_operand.vmem [shape: f32[1,512], index: 3, kind: input, shape index: {}]
  %s4 = inlined_call_operand.vmem [shape: bf16[128,128], index: 4, kind: input, shape index: {}]
  %s5 = inlined_call_operand.vmem [shape: f32[1,128], index: 5, kind: input, shape index: {}]
  %s6 = inlined_call_operand.vmem [shape: f32[8,128], index: 6, kind: output, shape index: {}]
  %s7 = sld [smem:[#allocation0]]
  $region42: #{lstm_seq2one.1} parent=0
    _
  %s9 = ssub.s32 1, %s7
  %s10 = scalar_select 0, %s9, %s7
  $region1: #{lstm_seq2one.1} parent=0
    #allocation3 [shape = 'u8[131072]{0}', space=vmem, size = 0x20000, scoped, tag = 'input window, operand 1, single buffered']
    #allocation4 [shape = 's32[1]{0}', space=sflag, size = 0x4, scoped, tag = 'scoped memory for lstm_seq2one.1']
    #allocation5 [shape = 'u8[131072]{0}', space=vmem, size = 0x20000, scoped, tag = 'input window, operand 2, single buffered']
    #allocation6 [shape = 's32[1]{0}', space=sflag, size = 0x4, scoped, tag = 'scoped memory for lstm_seq2one.1']
    %11 = vsyncpa [#allocation4], 0
    %12 = vsyncpa [#allocation6], 0
    // Predicated region
    $region2: #{lstm_seq2one.1} parent=1 // pred_check
      _
    $region3: #{lstm_seq2one.1} parent=1 // pred_check_branch
      %14 = sbr.rel (0) target = $region5
    $region4: #{lstm_seq2one.1} parent=1 // pred_region
      _
    $region5: #{lstm_seq2one.1} parent=1 // pred_fallthru
      _
    // Predicated region
    $region6: #{lstm_seq2one.1} parent=1 // pred_check
      _
    $region7: #{lstm_seq2one.1} parent=1 // pred_check_branch
      %16 = sbr.rel (0) target = $region9
    $region8: #{lstm_seq2one.1} parent=1 // pred_region
      %s18 = ssub.s32 4096, 4096
      %19 = vsyncadd [#allocation4], %s18
      %s20 = sshll.u32 [#allocation3], 4
      %s21 = int_to_ptr.vmem [resolvable:$true] %s20
      %26 = dma.hbm_to_vmem [thread:$0]  %s1, 4096, %s21, [#allocation4], 256, 256, 16
    $region9: #{lstm_seq2one.1} parent=1 // pred_fallthru
      _
    // Predicated region
    $region10: #{lstm_seq2one.1} parent=1 // pred_check
      _
    $region11: #{lstm_seq2one.1} parent=1 // pred_check_branch
      %28 = sbr.rel (0) target = $region13
    $region12: #{lstm_seq2one.1} parent=1 // pred_region
      %s30 = ssub.s32 4096, 4096
      %31 = vsyncadd [#allocation6], %s30
      %s32 = sshll.u32 [#allocation5], 4
      %s33 = int_to_ptr.vmem [resolvable:$true] %s32
      %38 = dma.hbm_to_vmem [thread:$0]  %s2, 4096, %s33, [#allocation6], 256, 256, 16
    $region13: #{lstm_seq2one.1} parent=1 // pred_fallthru
      _
    // Predicated region
    $region14: #{lstm_seq2one.1} parent=1 // pred_check
      _
    $region15: #{lstm_seq2one.1} parent=1 // pred_check_branch
      %40 = sbr.rel (0) target = $region17
    $region16: #{lstm_seq2one.1} parent=1 // pred_region
      _
    $region17: #{lstm_seq2one.1} parent=1 // pred_fallthru
      _
    // Predicated region
    $region18: #{lstm_seq2one.1} parent=1 // pred_check
      _
    $region19: #{lstm_seq2one.1} parent=1 // pred_check_branch
      %42 = sbr.rel (0) target = $region21
    $region20: #{lstm_seq2one.1} parent=1 // pred_region
      _
    $region21: #{lstm_seq2one.1} parent=1 // pred_fallthru
      _
    // Predicated region
    $region22: #{lstm_seq2one.1} parent=1 // pred_check
      _
    $region23: #{lstm_seq2one.1} parent=1 // pred_check_branch
      %44 = sbr.rel (0) target = $region25
    $region24: #{lstm_seq2one.1} parent=1 // pred_region
      _
    $region25: #{lstm_seq2one.1} parent=1 // pred_fallthru
      _
    // Predicated region
    $region26: #{lstm_seq2one.1} parent=1 // pred_check
      _
    $region27: #{lstm_seq2one.1} parent=1 // pred_check_branch
      %46 = sbr.rel (0) target = $region29
    $region28: #{lstm_seq2one.1} parent=1 // pred_region
      %47 = dma.done [#allocation4], 4096
    $region29: #{lstm_seq2one.1} parent=1 // pred_fallthru
      _
    // Predicated region
    $region30: #{lstm_seq2one.1} parent=1 // pred_check
      _
    $region31: #{lstm_seq2one.1} parent=1 // pred_check_branch
      %49 = sbr.rel (0) target = $region33
    $region32: #{lstm_seq2one.1} parent=1 // pred_region
      %50 = dma.done [#allocation6], 4096
    $region33: #{lstm_seq2one.1} parent=1 // pred_fallthru
      _
    %v52 = vld [vmem:[%s0] sm:$0xf]
    %v53 = vld [vmem:[%s0 + $0x4] sm:$0xf]
    %v54 = vld [vmem:[%s0 + $0x8] sm:$0xf]
    %v55 = vld [vmem:[%s0 + $0xc] sm:$0xf]
    %v56 = vld [vmem:[%s0 + $0x10] sm:$0xf]
    %v57 = vld [vmem:[%s0 + $0x14] sm:$0xf]
    %v58 = vld [vmem:[%s0 + $0x18] sm:$0xf]
    %v59 = vld [vmem:[%s0 + $0x1c] sm:$0xf]
    %v60 = vld [vmem:[#allocation3] sm:$0xff]
    %v61 = vld [vmem:[#allocation3 + $0x8] sm:$0xff]
    %v62 = vld [vmem:[#allocation3 + $0x10] sm:$0xff]
    %v63 = vld [vmem:[#allocation3 + $0x18] sm:$0xff]
    %v64 = vld [vmem:[#allocation3 + $0x20] sm:$0xff]
    %v65 = vld [vmem:[#allocation3 + $0x28] sm:$0xff]
    %v66 = vld [vmem:[#allocation3 + $0x30] sm:$0xff]
    %v67 = vld [vmem:[#allocation3 + $0x38] sm:$0xff]
    %v68 = vld [vmem:[#allocation3 + $0x40] sm:$0xff]
    %v69 = vld [vmem:[#allocation3 + $0x48] sm:$0xff]
    %v70 = vld [vmem:[#allocation3 + $0x50] sm:$0xff]
    %v71 = vld [vmem:[#allocation3 + $0x58] sm:$0xff]
    %v72 = vld [vmem:[#allocation3 + $0x60] sm:$0xff]
    %v73 = vld [vmem:[#allocation3 + $0x68] sm:$0xff]
    %v74 = vld [vmem:[#allocation3 + $0x70] sm:$0xff]
    %v75 = vld [vmem:[#allocation3 + $0x78] sm:$0xff]
    %v76 = vld [vmem:[#allocation3 + $0x80] sm:$0xff]
    %v77 = vld [vmem:[#allocation3 + $0x88] sm:$0xff]
    %v78 = vld [vmem:[#allocation3 + $0x90] sm:$0xff]
    %v79 = vld [vmem:[#allocation3 + $0x98] sm:$0xff]
    %v80 = vld [vmem:[#allocation3 + $0xa0] sm:$0xff]
    %v81 = vld [vmem:[#allocation3 + $0xa8] sm:$0xff]
    %v82 = vld [vmem:[#allocation3 + $0xb0] sm:$0xff]
    %v83 = vld [vmem:[#allocation3 + $0xb8] sm:$0xff]
    %v84 = vld [vmem:[#allocation3 + $0xc0] sm:$0xff]
    %v85 = vld [vmem:[#allocation3 + $0xc8] sm:$0xff]
    %v86 = vld [vmem:[#allocation3 + $0xd0] sm:$0xff]
    %v87 = vld [vmem:[#allocation3 + $0xd8] sm:$0xff]
    %v88 = vld [vmem:[#allocation3 + $0xe0] sm:$0xff]
    %v89 = vld [vmem:[#allocation3 + $0xe8] sm:$0xff]
    %v90 = vld [vmem:[#allocation3 + $0xf0] sm:$0xff]
    %v91 = vld [vmem:[#allocation3 + $0xf8] sm:$0xff]
    %v92 = vld [vmem:[%s3] sm:$0xf]
    %v94 = vlaneseq
    %v95 = vshrl.u32 %v94, 7
    %v96 = vsub.s32 0, %v95
    %v97 = vrot.slane %v92, %v96
    %v98 = vlaneseq
    %v99 = vshrl.u32 %v98, 7
    %v100 = vsub.s32 1, %v99
    %v101 = vrot.slane %v92, %v100
    %v102 = vlaneseq
    %v103 = vshrl.u32 %v102, 7
    %v104 = vsub.s32 2, %v103
    %v105 = vrot.slane %v92, %v104
    %v106 = vlaneseq
    %v107 = vshrl.u32 %v106, 7
    %v108 = vsub.s32 3, %v107
    %v109 = vrot.slane %v92, %v108
    %v122 = vunpack.c.l.b16 %v52
    %v123 = vunpack.c.l.b16 %v53
    %v124 = vunpack.c.l.b16 %v54
    %v125 = vunpack.c.l.b16 %v55
    %v126 = vunpack.c.l.b16 %v56
    %v127 = vunpack.c.l.b16 %v57
    %v128 = vunpack.c.l.b16 %v58
    %v129 = vunpack.c.l.b16 %v59
    %v130 = vpack.c.b16 %v123, %v122
    %v131 = vpack.c.b16 %v125, %v124
    %v132 = vpack.c.b16 %v127, %v126
    %v133 = vpack.c.b16 %v129, %v128
    %v170 = vunpack.c.l.b16 %v60
    %v171 = vunpack.c.h.b16 %v60
    %v172 = vunpack.c.l.b16 %v61
    %v173 = vunpack.c.h.b16 %v61
    %v174 = vunpack.c.l.b16 %v62
    %v175 = vunpack.c.h.b16 %v62
    %v176 = vunpack.c.l.b16 %v63
    %v177 = vunpack.c.h.b16 %v63
    %v178 = vunpack.c.l.b16 %v64
    %v179 = vunpack.c.h.b16 %v64
    %v180 = vunpack.c.l.b16 %v65
    %v181 = vunpack.c.h.b16 %v65
    %v182 = vunpack.c.l.b16 %v66
    %v183 = vunpack.c.h.b16 %v66
    %v184 = vunpack.c.l.b16 %v67
    %v185 = vunpack.c.h.b16 %v67
    %v186 = vunpack.c.l.b16 %v68
    %v187 = vunpack.c.h.b16 %v68
    %v188 = vunpack.c.l.b16 %v69
    %v189 = vunpack.c.h.b16 %v69
    %v190 = vunpack.c.l.b16 %v70
    %v191 = vunpack.c.h.b16 %v70
    %v192 = vunpack.c.l.b16 %v71
    %v193 = vunpack.c.h.b16 %v71
    %v194 = vunpack.c.l.b16 %v72
    %v195 = vunpack.c.h.b16 %v72
    %v196 = vunpack.c.l.b16 %v73
    %v197 = vunpack.c.h.b16 %v73
    %v198 = vunpack.c.l.b16 %v74
    %v199 = vunpack.c.h.b16 %v74
    %v200 = vunpack.c.l.b16 %v75
    %v201 = vunpack.c.h.b16 %v75
    %v202 = vunpack.c.l.b16 %v76
    %v203 = vunpack.c.h.b16 %v76
    %v204 = vunpack.c.l.b16 %v77
    %v205 = vunpack.c.h.b16 %v77
    %v206 = vunpack.c.l.b16 %v78
    %v207 = vunpack.c.h.b16 %v78
    %v208 = vunpack.c.l.b16 %v79
    %v209 = vunpack.c.h.b16 %v79
    %v210 = vunpack.c.l.b16 %v80
    %v211 = vunpack.c.h.b16 %v80
    %v212 = vunpack.c.l.b16 %v81
    %v213 = vunpack.c.h.b16 %v81
    %v214 = vunpack.c.l.b16 %v82
    %v215 = vunpack.c.h.b16 %v82
    %v216 = vunpack.c.l.b16 %v83
    %v217 = vunpack.c.h.b16 %v83
    %v218 = vunpack.c.l.b16 %v84
    %v219 = vunpack.c.h.b16 %v84
    %v220 = vunpack.c.l.b16 %v85
    %v221 = vunpack.c.h.b16 %v85
    %v222 = vunpack.c.l.b16 %v86
    %v223 = vunpack.c.h.b16 %v86
    %v224 = vunpack.c.l.b16 %v87
    %v225 = vunpack.c.h.b16 %v87
    %v226 = vunpack.c.l.b16 %v88
    %v227 = vunpack.c.h.b16 %v88
    %v228 = vunpack.c.l.b16 %v89
    %v229 = vunpack.c.h.b16 %v89
    %v230 = vunpack.c.l.b16 %v90
    %v231 = vunpack.c.h.b16 %v90
    %v232 = vunpack.c.l.b16 %v91
    %v233 = vunpack.c.h.b16 %v91
    %v234 = vpack.c.b16 %v174, %v170
    %v235 = vpack.c.b16 %v175, %v171
    %v236 = vpack.c.b16 %v176, %v172
    %v237 = vpack.c.b16 %v177, %v173
    %v238 = vpack.c.b16 %v182, %v178
    %v239 = vpack.c.b16 %v183, %v179
    %v240 = vpack.c.b16 %v184, %v180
    %v241 = vpack.c.b16 %v185, %v181
    %v242 = vpack.c.b16 %v190, %v186
    %v243 = vpack.c.b16 %v191, %v187
    %v244 = vpack.c.b16 %v192, %v188
    %v245 = vpack.c.b16 %v193, %v189
    %v246 = vpack.c.b16 %v198, %v194
    %v247 = vpack.c.b16 %v199, %v195
    %v248 = vpack.c.b16 %v200, %v196
    %v249 = vpack.c.b16 %v201, %v197
    %v250 = vpack.c.b16 %v206, %v202
    %v251 = vpack.c.b16 %v207, %v203
    %v252 = vpack.c.b16 %v208, %v204
    %v253 = vpack.c.b16 %v209, %v205
    %v254 = vpack.c.b16 %v214, %v210
    %v255 = vpack.c.b16 %v215, %v211
    %v256 = vpack.c.b16 %v216, %v212
    %v257 = vpack.c.b16 %v217, %v213
    %v258 = vpack.c.b16 %v222, %v218
    %v259 = vpack.c.b16 %v223, %v219
    %v260 = vpack.c.b16 %v224, %v220
    %v261 = vpack.c.b16 %v225, %v221
    %v262 = vpack.c.b16 %v230, %v226
    %v263 = vpack.c.b16 %v231, %v227
    %v264 = vpack.c.b16 %v232, %v228
    %v265 = vpack.c.b16 %v233, %v229
    %298 = vmatprep.subr.bf16.mxu0 %v235
    %299 = vmatpush1.bf16.msra.mxu0 %v234
    %300 = vmatprep.subr.bf16.mxu0 %v239
    %301 = vmatpush1.bf16.msra.mxu0 %v238
    %302 = vmatprep.subr.bf16.mxu0 %v243
    %303 = vmatpush1.bf16.msra.mxu0 %v242
    %304 = vmatprep.subr.bf16.mxu0 %v247
    %305 = vmatpush1.bf16.msra.mxu0 %v246
    %306 = vmatprep.subr.bf16.mxu0 %v251
    %307 = vmatpush1.bf16.msra.mxu0 %v250
    %308 = vmatprep.subr.bf16.mxu0 %v255
    %309 = vmatpush1.bf16.msra.mxu0 %v254
    %310 = vmatprep.subr.bf16.mxu0 %v259
    %311 = vmatpush1.bf16.msra.mxu0 %v258
    %312 = vmatprep.subr.bf16.mxu0 %v263
    %313 = vmatpush1.bf16.msra.mxu0 %v262
    %314 = vmatprep.subr.bf16.mxu0 0
    %315 = vmatpush1.bf16.msra.mxu0 0
    %316 = vmatprep.subr.bf16.mxu0 0
    %317 = vmatpush1.bf16.msra.mxu0 0
    %318 = vmatprep.subr.bf16.mxu0 0
    %319 = vmatpush1.bf16.msra.mxu0 0
    %320 = vmatprep.subr.bf16.mxu0 0
    %321 = vmatpush1.bf16.msra.mxu0 0
    %322 = vmatprep.subr.bf16.mxu0 0
    %323 = vmatpush1.bf16.msra.mxu0 0
    %324 = vmatprep.subr.bf16.mxu0 0
    %325 = vmatpush1.bf16.msra.mxu0 0
    %326 = vmatprep.subr.bf16.mxu0 0
    %327 = vmatpush1.bf16.msra.mxu0 0
    %328 = vmatprep.subr.bf16.mxu0 0
    %329 = vmatpush1.bf16.msra.mxu0 0
    %330 = vmatprep.mubr.bf16.mxu0 0
    %331 = vmatmul.mubr.bf16.gmra.mrb[0].mxu0 %v130
    %v332 = vpop.f32.mrb[0].mxu0
    %v333 = vadd.f32 %v97, %v332
    %v334 = vpop.f32.mrb[0].mxu0
    %v335 = vadd.f32 %v101, %v334
    %v336 = vpop.f32.mrb[0].mxu0
    %v337 = vadd.f32 %v97, %v336
    %v338 = vpop.f32.mrb[0].mxu0
    %v339 = vadd.f32 %v101, %v338
    %340 = vmatprep.mubr.bf16.mxu0 0
    %341 = vmatmul.mubr.bf16.gmra.mrb[0].mxu0 %v131
    %v342 = vpop.f32.mrb[0].mxu0
    %v343 = vadd.f32 %v97, %v342
    %v344 = vpop.f32.mrb[0].mxu0
    %v345 = vadd.f32 %v101, %v344
    %v346 = vpop.f32.mrb[0].mxu0
    %v347 = vadd.f32 %v97, %v346
    %v348 = vpop.f32.mrb[0].mxu0
    %v349 = vadd.f32 %v101, %v348
    %350 = vmatprep.mubr.bf16.mxu0 0
    %351 = vmatmul.mubr.bf16.gmra.mrb[0].mxu0 %v132
    %v352 = vpop.f32.mrb[0].mxu0
    %v353 = vadd.f32 %v97, %v352
    %v354 = vpop.f32.mrb[0].mxu0
    %v355 = vadd.f32 %v101, %v354
    %v356 = vpop.f32.mrb[0].mxu0
    %v357 = vadd.f32 %v97, %v356
    %v358 = vpop.f32.mrb[0].mxu0
    %v359 = vadd.f32 %v101, %v358
    %360 = vmatprep.mubr.bf16.mxu0 0
    %361 = vmatmul.mubr.bf16.gmra.mrb[0].mxu0 %v133
    %v362 = vpop.f32.mrb[0].mxu0
    %v363 = vadd.f32 %v97, %v362
    %v364 = vpop.f32.mrb[0].mxu0
    %v365 = vadd.f32 %v101, %v364
    %v366 = vpop.f32.mrb[0].mxu0
    %v367 = vadd.f32 %v97, %v366
    %v368 = vpop.f32.mrb[0].mxu0
    %v369 = vadd.f32 %v101, %v368
    %370 = vdwg.mxu0
    %371 = vmatprep.subr.bf16.mxu0 %v237
    %372 = vmatpush1.bf16.msra.mxu0 %v236
    %373 = vmatprep.subr.bf16.mxu0 %v241
    %374 = vmatpush1.bf16.msra.mxu0 %v240
    %375 = vmatprep.subr.bf16.mxu0 %v245
    %376 = vmatpush1.bf16.msra.mxu0 %v244
    %377 = vmatprep.subr.bf16.mxu0 %v249
    %378 = vmatpush1.bf16.msra.mxu0 %v248
    %379 = vmatprep.subr.bf16.mxu0 %v253
    %380 = vmatpush1.bf16.msra.mxu0 %v252
    %381 = vmatprep.subr.bf16.mxu0 %v257
    %382 = vmatpush1.bf16.msra.mxu0 %v256
    %383 = vmatprep.subr.bf16.mxu0 %v261
    %384 = vmatpush1.bf16.msra.mxu0 %v260
    %385 = vmatprep.subr.bf16.mxu0 %v265
    %386 = vmatpush1.bf16.msra.mxu0 %v264
    %387 = vmatprep.subr.bf16.mxu0 0
    %388 = vmatpush1.bf16.msra.mxu0 0
    %389 = vmatprep.subr.bf16.mxu0 0
    %390 = vmatpush1.bf16.msra.mxu0 0
    %391 = vmatprep.subr.bf16.mxu0 0
    %392 = vmatpush1.bf16.msra.mxu0 0
    %393 = vmatprep.subr.bf16.mxu0 0
    %394 = vmatpush1.bf16.msra.mxu0 0
    %395 = vmatprep.subr.bf16.mxu0 0
    %396 = vmatpush1.bf16.msra.mxu0 0
    %397 = vmatprep.subr.bf16.mxu0 0
    %398 = vmatpush1.bf16.msra.mxu0 0
    %399 = vmatprep.subr.bf16.mxu0 0
    %400 = vmatpush1.bf16.msra.mxu0 0
    %401 = vmatprep.subr.bf16.mxu0 0
    %402 = vmatpush1.bf16.msra.mxu0 0
    %403 = vmatprep.mubr.bf16.mxu0 0
    %404 = vmatmul.mubr.bf16.gmra.mrb[0].mxu0 %v130
    %v405 = vpop.f32.mrb[0].mxu0
    %v406 = vadd.f32 %v105, %v405
    %v407 = vpop.f32.mrb[0].mxu0
    %v408 = vadd.f32 %v109, %v407
    %v409 = vpop.f32.mrb[0].mxu0
    %v410 = vadd.f32 %v105, %v409
    %v411 = vpop.f32.mrb[0].mxu0
    %v412 = vadd.f32 %v109, %v411
    %413 = vmatprep.mubr.bf16.mxu0 0
    %414 = vmatmul.mubr.bf16.gmra.mrb[0].mxu0 %v131
    %v415 = vpop.f32.mrb[0].mxu0
    %v416 = vadd.f32 %v105, %v415
    %v417 = vpop.f32.mrb[0].mxu0
    %v418 = vadd.f32 %v109, %v417
    %v419 = vpop.f32.mrb[0].mxu0
    %v420 = vadd.f32 %v105, %v419
    %v421 = vpop.f32.mrb[0].mxu0
    %v422 = vadd.f32 %v109, %v421
    %423 = vmatprep.mubr.bf16.mxu0 0
    %424 = vmatmul.mubr.bf16.gmra.mrb[0].mxu0 %v132
    %v425 = vpop.f32.mrb[0].mxu0
    %v426 = vadd.f32 %v105, %v425
    %v427 = vpop.f32.mrb[0].mxu0
    %v428 = vadd.f32 %v109, %v427
    %v429 = vpop.f32.mrb[0].mxu0
    %v430 = vadd.f32 %v105, %v429
    %v431 = vpop.f32.mrb[0].mxu0
    %v432 = vadd.f32 %v109, %v431
    %433 = vmatprep.mubr.bf16.mxu0 0
    %434 = vmatmul.mubr.bf16.gmra.mrb[0].mxu0 %v133
    %v435 = vpop.f32.mrb[0].mxu0
    %v436 = vadd.f32 %v105, %v435
    %v437 = vpop.f32.mrb[0].mxu0
    %v438 = vadd.f32 %v109, %v437
    %v439 = vpop.f32.mrb[0].mxu0
    %v440 = vadd.f32 %v105, %v439
    %v441 = vpop.f32.mrb[0].mxu0
    %v442 = vadd.f32 %v109, %v441
    %443 = vdwg.mxu0
    %444 = vst [vmem:[#allocation2] sm:$0xff] %v333
    %445 = vst [vmem:[#allocation2 + $0x8] sm:$0xff] %v335
    %446 = vst [vmem:[#allocation2 + $0x10] sm:$0xff] %v406
    %447 = vst [vmem:[#allocation2 + $0x18] sm:$0xff] %v408
    %448 = vst [vmem:[#allocation2 + $0x20] sm:$0xff] %v337
    %449 = vst [vmem:[#allocation2 + $0x28] sm:$0xff] %v339
    %450 = vst [vmem:[#allocation2 + $0x30] sm:$0xff] %v410
    %451 = vst [vmem:[#allocation2 + $0x38] sm:$0xff] %v412
    %452 = vst [vmem:[#allocation2 + $0x40] sm:$0xff] %v343
    %453 = vst [vmem:[#allocation2 + $0x48] sm:$0xff] %v345
    %454 = vst [vmem:[#allocation2 + $0x50] sm:$0xff] %v416
    %455 = vst [vmem:[#allocation2 + $0x58] sm:$0xff] %v418
    %456 = vst [vmem:[#allocation2 + $0x60] sm:$0xff] %v347
    %457 = vst [vmem:[#allocation2 + $0x68] sm:$0xff] %v349
    %458 = vst [vmem:[#allocation2 + $0x70] sm:$0xff] %v420
    %459 = vst [vmem:[#allocation2 + $0x78] sm:$0xff] %v422
    %460 = vst [vmem:[#allocation2 + $0x80] sm:$0xff] %v353
    %461 = vst [vmem:[#allocation2 + $0x88] sm:$0xff] %v355
    %462 = vst [vmem:[#allocation2 + $0x90] sm:$0xff] %v426
    %463 = vst [vmem:[#allocation2 + $0x98] sm:$0xff] %v428
    %464 = vst [vmem:[#allocation2 + $0xa0] sm:$0xff] %v357
    %465 = vst [vmem:[#allocation2 + $0xa8] sm:$0xff] %v359
    %466 = vst [vmem:[#allocation2 + $0xb0] sm:$0xff] %v430
    %467 = vst [vmem:[#allocation2 + $0xb8] sm:$0xff] %v432
    %468 = vst [vmem:[#allocation2 + $0xc0] sm:$0xff] %v363
    %469 = vst [vmem:[#allocation2 + $0xc8] sm:$0xff] %v365
    %470 = vst [vmem:[#allocation2 + $0xd0] sm:$0xff] %v436
    %471 = vst [vmem:[#allocation2 + $0xd8] sm:$0xff] %v438
    %472 = vst [vmem:[#allocation2 + $0xe0] sm:$0xff] %v367
    %473 = vst [vmem:[#allocation2 + $0xe8] sm:$0xff] %v369
    %474 = vst [vmem:[#allocation2 + $0xf0] sm:$0xff] %v440
    %475 = vst [vmem:[#allocation2 + $0xf8] sm:$0xff] %v442
    %v476 = vld [vmem:[#allocation5] sm:$0xff]
    %v477 = vld [vmem:[#allocation5 + $0x8] sm:$0xff]
    %v478 = vld [vmem:[#allocation5 + $0x10] sm:$0xff]
    %v479 = vld [vmem:[#allocation5 + $0x18] sm:$0xff]
    %v480 = vld [vmem:[#allocation5 + $0x20] sm:$0xff]
    %v481 = vld [vmem:[#allocation5 + $0x28] sm:$0xff]
    %v482 = vld [vmem:[#allocation5 + $0x30] sm:$0xff]
    %v483 = vld [vmem:[#allocation5 + $0x38] sm:$0xff]
    %v484 = vld [vmem:[#allocation5 + $0x40] sm:$0xff]
    %v485 = vld [vmem:[#allocation5 + $0x48] sm:$0xff]
    %v486 = vld [vmem:[#allocation5 + $0x50] sm:$0xff]
    %v487 = vld [vmem:[#allocation5 + $0x58] sm:$0xff]
    %v488 = vld [vmem:[#allocation5 + $0x60] sm:$0xff]
    %v489 = vld [vmem:[#allocation5 + $0x68] sm:$0xff]
    %v490 = vld [vmem:[#allocation5 + $0x70] sm:$0xff]
    %v491 = vld [vmem:[#allocation5 + $0x78] sm:$0xff]
    %v492 = vld [vmem:[#allocation5 + $0x80] sm:$0xff]
    %v493 = vld [vmem:[#allocation5 + $0x88] sm:$0xff]
    %v494 = vld [vmem:[#allocation5 + $0x90] sm:$0xff]
    %v495 = vld [vmem:[#allocation5 + $0x98] sm:$0xff]
    %v496 = vld [vmem:[#allocation5 + $0xa0] sm:$0xff]
    %v497 = vld [vmem:[#allocation5 + $0xa8] sm:$0xff]
    %v498 = vld [vmem:[#allocation5 + $0xb0] sm:$0xff]
    %v499 = vld [vmem:[#allocation5 + $0xb8] sm:$0xff]
    %v500 = vld [vmem:[#allocation5 + $0xc0] sm:$0xff]
    %v501 = vld [vmem:[#allocation5 + $0xc8] sm:$0xff]
    %v502 = vld [vmem:[#allocation5 + $0xd0] sm:$0xff]
    %v503 = vld [vmem:[#allocation5 + $0xd8] sm:$0xff]
    %v504 = vld [vmem:[#allocation5 + $0xe0] sm:$0xff]
    %v505 = vld [vmem:[#allocation5 + $0xe8] sm:$0xff]
    %v506 = vld [vmem:[#allocation5 + $0xf0] sm:$0xff]
    %v507 = vld [vmem:[#allocation5 + $0xf8] sm:$0xff]
    %s508 = smul.u32 0, 4
    %s509 = smul.addr %s508, 8
    %s510 = scalar_lea.vmem [#allocation2], %s509
    %v511 = vld [vmem:[%s510] sm:$0xff]
    %v512 = vld [vmem:[%s510 + $0x8] sm:$0xff]
    %v513 = vld [vmem:[%s510 + $0x10] sm:$0xff]
    %v514 = vld [vmem:[%s510 + $0x18] sm:$0xff]
    %v531 = vunpack.c.l.b16 %v476
    %v532 = vunpack.c.l.b16 %v478
    %v533 = vunpack.c.l.b16 %v480
    %v534 = vunpack.c.l.b16 %v482
    %v535 = vunpack.c.l.b16 %v484
    %v536 = vunpack.c.l.b16 %v486
    %v537 = vunpack.c.l.b16 %v488
    %v538 = vunpack.c.l.b16 %v490
    %v539 = vunpack.c.l.b16 %v492
    %v540 = vunpack.c.l.b16 %v494
    %v541 = vunpack.c.l.b16 %v496
    %v542 = vunpack.c.l.b16 %v498
    %v543 = vunpack.c.l.b16 %v500
    %v544 = vunpack.c.l.b16 %v502
    %v545 = vunpack.c.l.b16 %v504
    %v546 = vunpack.c.l.b16 %v506
    %v547 = vpack.c.b16 %v532, %v531
    %v548 = vpack.c.b16 %v534, %v533
    %v549 = vpack.c.b16 %v536, %v535
    %v550 = vpack.c.b16 %v538, %v537
    %v551 = vpack.c.b16 %v540, %v539
    %v552 = vpack.c.b16 %v542, %v541
    %v553 = vpack.c.b16 %v544, %v543
    %v554 = vpack.c.b16 %v546, %v545
    %563 = vmatprep.subr.bf16.mxu0 0
    %564 = vmatpush1.bf16.msra.mxu0 %v547
    %565 = vmatprep.subr.bf16.mxu0 0
    %566 = vmatpush1.bf16.msra.mxu0 %v548
    %567 = vmatprep.subr.bf16.mxu0 0
    %568 = vmatpush1.bf16.msra.mxu0 %v549
    %569 = vmatprep.subr.bf16.mxu0 0
    %570 = vmatpush1.bf16.msra.mxu0 %v550
    %571 = vmatprep.subr.bf16.mxu0 0
    %572 = vmatpush1.bf16.msra.mxu0 %v551
    %573 = vmatprep.subr.bf16.mxu0 0
    %574 = vmatpush1.bf16.msra.mxu0 %v552
    %575 = vmatprep.subr.bf16.mxu0 0
    %576 = vmatpush1.bf16.msra.mxu0 %v553
    %577 = vmatprep.subr.bf16.mxu0 0
    %578 = vmatpush1.bf16.msra.mxu0 %v554
    %579 = vmatprep.subr.bf16.mxu0 0
    %580 = vmatpush1.bf16.msra.mxu0 0
    %581 = vmatprep.subr.bf16.mxu0 0
    %582 = vmatpush1.bf16.msra.mxu0 0
    %583 = vmatprep.subr.bf16.mxu0 0
    %584 = vmatpush1.bf16.msra.mxu0 0
    %585 = vmatprep.subr.bf16.mxu0 0
    %586 = vmatpush1.bf16.msra.mxu0 0
    %587 = vmatprep.subr.bf16.mxu0 0
    %588 = vmatpush1.bf16.msra.mxu0 0
    %589 = vmatprep.subr.bf16.mxu0 0
    %590 = vmatpush1.bf16.msra.mxu0 0
    %591 = vmatprep.subr.bf16.mxu0 0
    %592 = vmatpush1.bf16.msra.mxu0 0
    %593 = vmatprep.subr.bf16.mxu0 0
    %594 = vmatpush1.bf16.msra.mxu0 0
    %595 = vmatprep.mubr.bf16.mxu0 0
    %596 = vmatmul.mubr.bf16.gmra.mrb[0].mxu0 0
    %v597 = vpop.f32.mrb[0].mxu0
    %v598 = vadd.f32 0.0, %v597
    %v599 = vpop.f32.mrb[0].mxu0
    %v600 = vpop.f32.mrb[0].mxu0
    %v601 = vpop.f32.mrb[0].mxu0
    %602 = vdwg.mxu0
    %v603 = vadd.f32 %v511, %v598
    %v604 = vmul.f32 %v603, 0.5
    %v605 = vtanh.pop %v604
    %v606 = vmul.f32 %v605, 0.5
    %v607 = vadd.f32 %v606, 0.5
    %v608 = vunpack.c.h.b16 %v476
    %v609 = vunpack.c.h.b16 %v478
    %v610 = vunpack.c.h.b16 %v480
    %v611 = vunpack.c.h.b16 %v482
    %v612 = vunpack.c.h.b16 %v484
    %v613 = vunpack.c.h.b16 %v486
    %v614 = vunpack.c.h.b16 %v488
    %v615 = vunpack.c.h.b16 %v490
    %v616 = vunpack.c.h.b16 %v492
    %v617 = vunpack.c.h.b16 %v494
    %v618 = vunpack.c.h.b16 %v496
    %v619 = vunpack.c.h.b16 %v498
    %v620 = vunpack.c.h.b16 %v500
    %v621 = vunpack.c.h.b16 %v502
    %v622 = vunpack.c.h.b16 %v504
    %v623 = vunpack.c.h.b16 %v506
    %v624 = vpack.c.b16 %v609, %v608
    %v625 = vpack.c.b16 %v611, %v610
    %v626 = vpack.c.b16 %v613, %v612
    %v627 = vpack.c.b16 %v615, %v614
    %v628 = vpack.c.b16 %v617, %v616
    %v629 = vpack.c.b16 %v619, %v618
    %v630 = vpack.c.b16 %v621, %v620
    %v631 = vpack.c.b16 %v623, %v622
    %640 = vmatprep.subr.bf16.mxu0 0
    %641 = vmatpush1.bf16.msra.mxu0 %v624
    %642 = vmatprep.subr.bf16.mxu0 0
    %643 = vmatpush1.bf16.msra.mxu0 %v625
    %644 = vmatprep.subr.bf16.mxu0 0
    %645 = vmatpush1.bf16.msra.mxu0 %v626
    %646 = vmatprep.subr.bf16.mxu0 0
    %647 = vmatpush1.bf16.msra.mxu0 %v627
    %648 = vmatprep.subr.bf16.mxu0 0
    %649 = vmatpush1.bf16.msra.mxu0 %v628
    %650 = vmatprep.subr.bf16.mxu0 0
    %651 = vmatpush1.bf16.msra.mxu0 %v629
    %652 = vmatprep.subr.bf16.mxu0 0
    %653 = vmatpush1.bf16.msra.mxu0 %v630
    %654 = vmatprep.subr.bf16.mxu0 0
    %655 = vmatpush1.bf16.msra.mxu0 %v631
    %656 = vmatprep.subr.bf16.mxu0 0
    %657 = vmatpush1.bf16.msra.mxu0 0
    %658 = vmatprep.subr.bf16.mxu0 0
    %659 = vmatpush1.bf16.msra.mxu0 0
    %660 = vmatprep.subr.bf16.mxu0 0
    %661 = vmatpush1.bf16.msra.mxu0 0
    %662 = vmatprep.subr.bf16.mxu0 0
    %663 = vmatpush1.bf16.msra.mxu0 0
    %664 = vmatprep.subr.bf16.mxu0 0
    %665 = vmatpush1.bf16.msra.mxu0 0
    %666 = vmatprep.subr.bf16.mxu0 0
    %667 = vmatpush1.bf16.msra.mxu0 0
    %668 = vmatprep.subr.bf16.mxu0 0
    %669 = vmatpush1.bf16.msra.mxu0 0
    %670 = vmatprep.subr.bf16.mxu0 0
    %671 = vmatpush1.bf16.msra.mxu0 0
    %672 = vmatprep.mubr.bf16.mxu0 0
    %673 = vmatmul.mubr.bf16.gmra.mrb[0].mxu0 0
    %v674 = vpop.f32.mrb[0].mxu0
    %v675 = vadd.f32 0.0, %v674
    %v676 = vpop.f32.mrb[0].mxu0
    %v677 = vpop.f32.mrb[0].mxu0
    %v678 = vpop.f32.mrb[0].mxu0
    %679 = vdwg.mxu0
    %v680 = vadd.f32 %v512, %v675
    %v681 = vmul.f32 %v680, 0.5
    %v682 = vtanh.pop %v681
    %v683 = vmul.f32 %v682, 0.5
    %v684 = vadd.f32 %v683, 0.5
    %v701 = vunpack.c.l.b16 %v477
    %v702 = vunpack.c.l.b16 %v479
    %v703 = vunpack.c.l.b16 %v481
    %v704 = vunpack.c.l.b16 %v483
    %v705 = vunpack.c.l.b16 %v485
    %v706 = vunpack.c.l.b16 %v487
    %v707 = vunpack.c.l.b16 %v489
    %v708 = vunpack.c.l.b16 %v491
    %v709 = vunpack.c.l.b16 %v493
    %v710 = vunpack.c.l.b16 %v495
    %v711 = vunpack.c.l.b16 %v497
    %v712 = vunpack.c.l.b16 %v499
    %v713 = vunpack.c.l.b16 %v501
    %v714 = vunpack.c.l.b16 %v503
    %v715 = vunpack.c.l.b16 %v505
    %v716 = vunpack.c.l.b16 %v507
    %v717 = vpack.c.b16 %v702, %v701
    %v718 = vpack.c.b16 %v704, %v703
    %v719 = vpack.c.b16 %v706, %v705
    %v720 = vpack.c.b16 %v708, %v707
    %v721 = vpack.c.b16 %v710, %v709
    %v722 = vpack.c.b16 %v712, %v711
    %v723 = vpack.c.b16 %v714, %v713
    %v724 = vpack.c.b16 %v716, %v715
    %733 = vmatprep.subr.bf16.mxu0 0
    %734 = vmatpush1.bf16.msra.mxu0 %v717
    %735 = vmatprep.subr.bf16.mxu0 0
    %736 = vmatpush1.bf16.msra.mxu0 %v718
    %737 = vmatprep.subr.bf16.mxu0 0
    %738 = vmatpush1.bf16.msra.mxu0 %v719
    %739 = vmatprep.subr.bf16.mxu0 0
    %740 = vmatpush1.bf16.msra.mxu0 %v720
    %741 = vmatprep.subr.bf16.mxu0 0
    %742 = vmatpush1.bf16.msra.mxu0 %v721
    %743 = vmatprep.subr.bf16.mxu0 0
    %744 = vmatpush1.bf16.msra.mxu0 %v722
    %745 = vmatprep.subr.bf16.mxu0 0
    %746 = vmatpush1.bf16.msra.mxu0 %v723
    %747 = vmatprep.subr.bf16.mxu0 0
    %748 = vmatpush1.bf16.msra.mxu0 %v724
    %749 = vmatprep.subr.bf16.mxu0 0
    %750 = vmatpush1.bf16.msra.mxu0 0
    %751 = vmatprep.subr.bf16.mxu0 0
    %752 = vmatpush1.bf16.msra.mxu0 0
    %753 = vmatprep.subr.bf16.mxu0 0
    %754 = vmatpush1.bf16.msra.mxu0 0
    %755 = vmatprep.subr.bf16.mxu0 0
    %756 = vmatpush1.bf16.msra.mxu0 0
    %757 = vmatprep.subr.bf16.mxu0 0
    %758 = vmatpush1.bf16.msra.mxu0 0
    %759 = vmatprep.subr.bf16.mxu0 0
    %760 = vmatpush1.bf16.msra.mxu0 0
    %761 = vmatprep.subr.bf16.mxu0 0
    %762 = vmatpush1.bf16.msra.mxu0 0
    %763 = vmatprep.subr.bf16.mxu0 0
    %764 = vmatpush1.bf16.msra.mxu0 0
    %765 = vmatprep.mubr.bf16.mxu0 0
    %766 = vmatmul.mubr.bf16.gmra.mrb[0].mxu0 0
    %v767 = vpop.f32.mrb[0].mxu0
    %v768 = vadd.f32 0.0, %v767
    %v769 = vpop.f32.mrb[0].mxu0
    %v770 = vpop.f32.mrb[0].mxu0
    %v771 = vpop.f32.mrb[0].mxu0
    %772 = vdwg.mxu0
    %v773 = vadd.f32 %v513, %v768
    %v774 = vtanh.pop %v773
    %v775 = vunpack.c.h.b16 %v477
    %v776 = vunpack.c.h.b16 %v479
    %v777 = vunpack.c.h.b16 %v481
    %v778 = vunpack.c.h.b16 %v483
    %v779 = vunpack.c.h.b16 %v485
    %v780 = vunpack.c.h.b16 %v487
    %v781 = vunpack.c.h.b16 %v489
    %v782 = vunpack.c.h.b16 %v491
    %v783 = vunpack.c.h.b16 %v493
    %v784 = vunpack.c.h.b16 %v495
    %v785 = vunpack.c.h.b16 %v497
    %v786 = vunpack.c.h.b16 %v499
    %v787 = vunpack.c.h.b16 %v501
    %v788 = vunpack.c.h.b16 %v503
    %v789 = vunpack.c.h.b16 %v505
    %v790 = vunpack.c.h.b16 %v507
    %v791 = vpack.c.b16 %v776, %v775
    %v792 = vpack.c.b16 %v778, %v777
    %v793 = vpack.c.b16 %v780, %v779
    %v794 = vpack.c.b16 %v782, %v781
    %v795 = vpack.c.b16 %v784, %v783
    %v796 = vpack.c.b16 %v786, %v785
    %v797 = vpack.c.b16 %v788, %v787
    %v798 = vpack.c.b16 %v790, %v789
    %807 = vmatprep.subr.bf16.mxu0 0
    %808 = vmatpush1.bf16.msra.mxu0 %v791
    %809 = vmatprep.subr.bf16.mxu0 0
    %810 = vmatpush1.bf16.msra.mxu0 %v792
    %811 = vmatprep.subr.bf16.mxu0 0
    %812 = vmatpush1.bf16.msra.mxu0 %v793
    %813 = vmatprep.subr.bf16.mxu0 0
    %814 = vmatpush1.bf16.msra.mxu0 %v794
    %815 = vmatprep.subr.bf16.mxu0 0
    %816 = vmatpush1.bf16.msra.mxu0 %v795
    %817 = vmatprep.subr.bf16.mxu0 0
    %818 = vmatpush1.bf16.msra.mxu0 %v796
    %819 = vmatprep.subr.bf16.mxu0 0
    %820 = vmatpush1.bf16.msra.mxu0 %v797
    %821 = vmatprep.subr.bf16.mxu0 0
    %822 = vmatpush1.bf16.msra.mxu0 %v798
    %823 = vmatprep.subr.bf16.mxu0 0
    %824 = vmatpush1.bf16.msra.mxu0 0
    %825 = vmatprep.subr.bf16.mxu0 0
    %826 = vmatpush1.bf16.msra.mxu0 0
    %827 = vmatprep.subr.bf16.mxu0 0
    %828 = vmatpush1.bf16.msra.mxu0 0
    %829 = vmatprep.subr.bf16.mxu0 0
    %830 = vmatpush1.bf16.msra.mxu0 0
    %831 = vmatprep.subr.bf16.mxu0 0
    %832 = vmatpush1.bf16.msra.mxu0 0
    %833 = vmatprep.subr.bf16.mxu0 0
    %834 = vmatpush1.bf16.msra.mxu0 0
    %835 = vmatprep.subr.bf16.mxu0 0
    %836 = vmatpush1.bf16.msra.mxu0 0
    %837 = vmatprep.subr.bf16.mxu0 0
    %838 = vmatpush1.bf16.msra.mxu0 0
    %839 = vmatprep.mubr.bf16.mxu0 0
    %840 = vmatmul.mubr.bf16.gmra.mrb[0].mxu0 0
    %v841 = vpop.f32.mrb[0].mxu0
    %v842 = vadd.f32 0.0, %v841
    %v843 = vpop.f32.mrb[0].mxu0
    %v844 = vpop.f32.mrb[0].mxu0
    %v845 = vpop.f32.mrb[0].mxu0
    %846 = vdwg.mxu0
    %v847 = vadd.f32 %v514, %v842
    %v848 = vmul.f32 %v847, 0.5
    %v849 = vtanh.pop %v848
    %v850 = vmul.f32 %v849, 0.5
    %v851 = vadd.f32 %v850, 0.5
    %v852 = vmul.f32 %v684, 0.0
    %v853 = vmul.f32 %v607, %v774
    %v854 = vadd.f32 %v852, %v853
    %v855 = vtanh.pop %v854
    %v856 = vmul.f32 %v851, %v855
    %v857 = vpack.c.bf16 %v856, %v856
    %s858 = smul.u32 1, 4
    %s859 = smul.addr %s858, 8
    %s860 = scalar_lea.vmem [#allocation2], %s859
    %v861 = vld [vmem:[%s860] sm:$0xff]
    %v862 = vld [vmem:[%s860 + $0x8] sm:$0xff]
    %v863 = vld [vmem:[%s860 + $0x10] sm:$0xff]
    %v864 = vld [vmem:[%s860 + $0x18] sm:$0xff]
    %865 = vmatprep.subr.bf16.mxu0 0
    %866 = vmatpush1.bf16.msra.mxu0 %v547
    %867 = vmatprep.subr.bf16.mxu0 0
    %868 = vmatpush1.bf16.msra.mxu0 %v548
    %869 = vmatprep.subr.bf16.mxu0 0
    %870 = vmatpush1.bf16.msra.mxu0 %v549
    %871 = vmatprep.subr.bf16.mxu0 0
    %872 = vmatpush1.bf16.msra.mxu0 %v550
    %873 = vmatprep.subr.bf16.mxu0 0
    %874 = vmatpush1.bf16.msra.mxu0 %v551
    %875 = vmatprep.subr.bf16.mxu0 0
    %876 = vmatpush1.bf16.msra.mxu0 %v552
    %877 = vmatprep.subr.bf16.mxu0 0
    %878 = vmatpush1.bf16.msra.mxu0 %v553
    %879 = vmatprep.subr.bf16.mxu0 0
    %880 = vmatpush1.bf16.msra.mxu0 %v554
    %881 = vmatprep.subr.bf16.mxu0 0
    %882 = vmatpush1.bf16.msra.mxu0 0
    %883 = vmatprep.subr.bf16.mxu0 0
    %884 = vmatpush1.bf16.msra.mxu0 0
    %885 = vmatprep.subr.bf16.mxu0 0
    %886 = vmatpush1.bf16.msra.mxu0 0
    %887 = vmatprep.subr.bf16.mxu0 0
    %888 = vmatpush1.bf16.msra.mxu0 0
    %889 = vmatprep.subr.bf16.mxu0 0
    %890 = vmatpush1.bf16.msra.mxu0 0
    %891 = vmatprep.subr.bf16.mxu0 0
    %892 = vmatpush1.bf16.msra.mxu0 0
    %893 = vmatprep.subr.bf16.mxu0 0
    %894 = vmatpush1.bf16.msra.mxu0 0
    %895 = vmatprep.subr.bf16.mxu0 0
    %896 = vmatpush1.bf16.msra.mxu0 0
    %897 = vmatprep.mubr.bf16.mxu0 0
    %898 = vmatmul.mubr.bf16.gmra.mrb[0].mxu0 %v857
    %v899 = vpop.f32.mrb[0].mxu0
    %v900 = vadd.f32 0.0, %v899
    %v901 = vpop.f32.mrb[0].mxu0
    %v902 = vpop.f32.mrb[0].mxu0
    %v903 = vpop.f32.mrb[0].mxu0
    %904 = vdwg.mxu0
    %v905 = vadd.f32 %v861, %v900
    %v906 = vmul.f32 %v905, 0.5
    %v907 = vtanh.pop %v906
    %v908 = vmul.f32 %v907, 0.5
    %v909 = vadd.f32 %v908, 0.5
    %910 = vmatprep.subr.bf16.mxu0 0
    %911 = vmatpush1.bf16.msra.mxu0 %v624
    %912 = vmatprep.subr.bf16.mxu0 0
    %913 = vmatpush1.bf16.msra.mxu0 %v625
    %914 = vmatprep.subr.bf16.mxu0 0
    %915 = vmatpush1.bf16.msra.mxu0 %v626
    %916 = vmatprep.subr.bf16.mxu0 0
    %917 = vmatpush1.bf16.msra.mxu0 %v627
    %918 = vmatprep.subr.bf16.mxu0 0
    %919 = vmatpush1.bf16.msra.mxu0 %v628
    %920 = vmatprep.subr.bf16.mxu0 0
    %921 = vmatpush1.bf16.msra.mxu0 %v629
    %922 = vmatprep.subr.bf16.mxu0 0
    %923 = vmatpush1.bf16.msra.mxu0 %v630
    %924 = vmatprep.subr.bf16.mxu0 0
    %925 = vmatpush1.bf16.msra.mxu0 %v631
    %926 = vmatprep.subr.bf16.mxu0 0
    %927 = vmatpush1.bf16.msra.mxu0 0
    %928 = vmatprep.subr.bf16.mxu0 0
    %929 = vmatpush1.bf16.msra.mxu0 0
    %930 = vmatprep.subr.bf16.mxu0 0
    %931 = vmatpush1.bf16.msra.mxu0 0
    %932 = vmatprep.subr.bf16.mxu0 0
    %933 = vmatpush1.bf16.msra.mxu0 0
    %934 = vmatprep.subr.bf16.mxu0 0
    %935 = vmatpush1.bf16.msra.mxu0 0
    %936 = vmatprep.subr.bf16.mxu0 0
    %937 = vmatpush1.bf16.msra.mxu0 0
    %938 = vmatprep.subr.bf16.mxu0 0
    %939 = vmatpush1.bf16.msra.mxu0 0
    %940 = vmatprep.subr.bf16.mxu0 0
    %941 = vmatpush1.bf16.msra.mxu0 0
    %942 = vmatprep.mubr.bf16.mxu0 0
    %943 = vmatmul.mubr.bf16.gmra.mrb[0].mxu0 %v857
    %v944 = vpop.f32.mrb[0].mxu0
    %v945 = vadd.f32 0.0, %v944
    %v946 = vpop.f32.mrb[0].mxu0
    %v947 = vpop.f32.mrb[0].mxu0
    %v948 = vpop.f32.mrb[0].mxu0
    %949 = vdwg.mxu0
    %v950 = vadd.f32 %v862, %v945
    %v951 = vmul.f32 %v950, 0.5
    %v952 = vtanh.pop %v951
    %v953 = vmul.f32 %v952, 0.5
    %v954 = vadd.f32 %v953, 0.5
    %955 = vmatprep.subr.bf16.mxu0 0
    %956 = vmatpush1.bf16.msra.mxu0 %v717
    %957 = vmatprep.subr.bf16.mxu0 0
    %958 = vmatpush1.bf16.msra.mxu0 %v718
    %959 = vmatprep.subr.bf16.mxu0 0
    %960 = vmatpush1.bf16.msra.mxu0 %v719
    %961 = vmatprep.subr.bf16.mxu0 0
    %962 = vmatpush1.bf16.msra.mxu0 %v720
    %963 = vmatprep.subr.bf16.mxu0 0
    %964 = vmatpush1.bf16.msra.mxu0 %v721
    %965 = vmatprep.subr.bf16.mxu0 0
    %966 = vmatpush1.bf16.msra.mxu0 %v722
    %967 = vmatprep.subr.bf16.mxu0 0
    %968 = vmatpush1.bf16.msra.mxu0 %v723
    %969 = vmatprep.subr.bf16.mxu0 0
    %970 = vmatpush1.bf16.msra.mxu0 %v724
    %971 = vmatprep.subr.bf16.mxu0 0
    %972 = vmatpush1.bf16.msra.mxu0 0
    %973 = vmatprep.subr.bf16.mxu0 0
    %974 = vmatpush1.bf16.msra.mxu0 0
    %975 = vmatprep.subr.bf16.mxu0 0
    %976 = vmatpush1.bf16.msra.mxu0 0
    %977 = vmatprep.subr.bf16.mxu0 0
    %978 = vmatpush1.bf16.msra.mxu0 0
    %979 = vmatprep.subr.bf16.mxu0 0
    %980 = vmatpush1.bf16.msra.mxu0 0
    %981 = vmatprep.subr.bf16.mxu0 0
    %982 = vmatpush1.bf16.msra.mxu0 0
    %983 = vmatprep.subr.bf16.mxu0 0
    %984 = vmatpush1.bf16.msra.mxu0 0
    %985 = vmatprep.subr.bf16.mxu0 0
    %986 = vmatpush1.bf16.msra.mxu0 0
    %987 = vmatprep.mubr.bf16.mxu0 0
    %988 = vmatmul.mubr.bf16.gmra.mrb[0].mxu0 %v857
    %v989 = vpop.f32.mrb[0].mxu0
    %v990 = vadd.f32 0.0, %v989
    %v991 = vpop.f32.mrb[0].mxu0
    %v992 = vpop.f32.mrb[0].mxu0
    %v993 = vpop.f32.mrb[0].mxu0
    %994 = vdwg.mxu0
    %v995 = vadd.f32 %v863, %v990
    %v996 = vtanh.pop %v995
    %997 = vmatprep.subr.bf16.mxu0 0
    %998 = vmatpush1.bf16.msra.mxu0 %v791
    %999 = vmatprep.subr.bf16.mxu0 0
    %1000 = vmatpush1.bf16.msra.mxu0 %v792
    %1001 = vmatprep.subr.bf16.mxu0 0
    %1002 = vmatpush1.bf16.msra.mxu0 %v793
    %1003 = vmatprep.subr.bf16.mxu0 0
    %1004 = vmatpush1.bf16.msra.mxu0 %v794
    %1005 = vmatprep.subr.bf16.mxu0 0
    %1006 = vmatpush1.bf16.msra.mxu0 %v795
    %1007 = vmatprep.subr.bf16.mxu0 0
    %1008 = vmatpush1.bf16.msra.mxu0 %v796
    %1009 = vmatprep.subr.bf16.mxu0 0
    %1010 = vmatpush1.bf16.msra.mxu0 %v797
    %1011 = vmatprep.subr.bf16.mxu0 0
    %1012 = vmatpush1.bf16.msra.mxu0 %v798
    %1013 = vmatprep.subr.bf16.mxu0 0
    %1014 = vmatpush1.bf16.msra.mxu0 0
    %1015 = vmatprep.subr.bf16.mxu0 0
    %1016 = vmatpush1.bf16.msra.mxu0 0
    %1017 = vmatprep.subr.bf16.mxu0 0
    %1018 = vmatpush1.bf16.msra.mxu0 0
    %1019 = vmatprep.subr.bf16.mxu0 0
    %1020 = vmatpush1.bf16.msra.mxu0 0
    %1021 = vmatprep.subr.bf16.mxu0 0
    %1022 = vmatpush1.bf16.msra.mxu0 0
    %1023 = vmatprep.subr.bf16.mxu0 0
    %1024 = vmatpush1.bf16.msra.mxu0 0
    %1025 = vmatprep.subr.bf16.mxu0 0
    %1026 = vmatpush1.bf16.msra.mxu0 0
    %1027 = vmatprep.subr.bf16.mxu0 0
    %1028 = vmatpush1.bf16.msra.mxu0 0
    %1029 = vmatprep.mubr.bf16.mxu0 0
    %1030 = vmatmul.mubr.bf16.gmra.mrb[0].mxu0 %v857
    %v1031 = vpop.f32.mrb[0].mxu0
    %v1032 = vadd.f32 0.0, %v1031
    %v1033 = vpop.f32.mrb[0].mxu0
    %v1034 = vpop.f32.mrb[0].mxu0
    %v1035 = vpop.f32.mrb[0].mxu0
    %1036 = vdwg.mxu0
    %v1037 = vadd.f32 %v864, %v1032
    %v1038 = vmul.f32 %v1037, 0.5
    %v1039 = vtanh.pop %v1038
    %v1040 = vmul.f32 %v1039, 0.5
    %v1041 = vadd.f32 %v1040, 0.5
    %v1042 = vmul.f32 %v954, %v854
    %v1043 = vmul.f32 %v909, %v996
    %v1044 = vadd.f32 %v1042, %v1043
    %v1045 = vtanh.pop %v1044
    %v1046 = vmul.f32 %v1041, %v1045
    %v1047 = vpack.c.bf16 %v1046, %v1046
    %s1048 = smul.u32 2, 4
    %s1049 = smul.addr %s1048, 8
    %s1050 = scalar_lea.vmem [#allocation2], %s1049
    %v1051 = vld [vmem:[%s1050] sm:$0xff]
    %v1052 = vld [vmem:[%s1050 + $0x8] sm:$0xff]
    %v1053 = vld [vmem:[%s1050 + $0x10] sm:$0xff]
    %v1054 = vld [vmem:[%s1050 + $0x18] sm:$0xff]
    %1055 = vmatprep.subr.bf16.mxu0 0
    %1056 = vmatpush1.bf16.msra.mxu0 %v547
    %1057 = vmatprep.subr.bf16.mxu0 0
    %1058 = vmatpush1.bf16.msra.mxu0 %v548
    %1059 = vmatprep.subr.bf16.mxu0 0
    %1060 = vmatpush1.bf16.msra.mxu0 %v549
    %1061 = vmatprep.subr.bf16.mxu0 0
    %1062 = vmatpush1.bf16.msra.mxu0 %v550
    %1063 = vmatprep.subr.bf16.mxu0 0
    %1064 = vmatpush1.bf16.msra.mxu0 %v551
    %1065 = vmatprep.subr.bf16.mxu0 0
    %1066 = vmatpush1.bf16.msra.mxu0 %v552
    %1067 = vmatprep.subr.bf16.mxu0 0
    %1068 = vmatpush1.bf16.msra.mxu0 %v553
    %1069 = vmatprep.subr.bf16.mxu0 0
    %1070 = vmatpush1.bf16.msra.mxu0 %v554
    %1071 = vmatprep.subr.bf16.mxu0 0
    %1072 = vmatpush1.bf16.msra.mxu0 0
    %1073 = vmatprep.subr.bf16.mxu0 0
    %1074 = vmatpush1.bf16.msra.mxu0 0
    %1075 = vmatprep.subr.bf16.mxu0 0
    %1076 = vmatpush1.bf16.msra.mxu0 0
    %1077 = vmatprep.subr.bf16.mxu0 0
    %1078 = vmatpush1.bf16.msra.mxu0 0
    %1079 = vmatprep.subr.bf16.mxu0 0
    %1080 = vmatpush1.bf16.msra.mxu0 0
    %1081 = vmatprep.subr.bf16.mxu0 0
    %1082 = vmatpush1.bf16.msra.mxu0 0
    %1083 = vmatprep.subr.bf16.mxu0 0
    %1084 = vmatpush1.bf16.msra.mxu0 0
    %1085 = vmatprep.subr.bf16.mxu0 0
    %1086 = vmatpush1.bf16.msra.mxu0 0
    %1087 = vmatprep.mubr.bf16.mxu0 0
    %1088 = vmatmul.mubr.bf16.gmra.mrb[0].mxu0 %v1047
    %v1089 = vpop.f32.mrb[0].mxu0
    %v1090 = vadd.f32 0.0, %v1089
    %v1091 = vpop.f32.mrb[0].mxu0
    %v1092 = vpop.f32.mrb[0].mxu0
    %v1093 = vpop.f32.mrb[0].mxu0
    %1094 = vdwg.mxu0
    %v1095 = vadd.f32 %v1051, %v1090
    %v1096 = vmul.f32 %v1095, 0.5
    %v1097 = vtanh.pop %v1096
    %v1098 = vmul.f32 %v1097, 0.5
    %v1099 = vadd.f32 %v1098, 0.5
    %1100 = vmatprep.subr.bf16.mxu0 0
    %1101 = vmatpush1.bf16.msra.mxu0 %v624
    %1102 = vmatprep.subr.bf16.mxu0 0
    %1103 = vmatpush1.bf16.msra.mxu0 %v625
    %1104 = vmatprep.subr.bf16.mxu0 0
    %1105 = vmatpush1.bf16.msra.mxu0 %v626
    %1106 = vmatprep.subr.bf16.mxu0 0
    %1107 = vmatpush1.bf16.msra.mxu0 %v627
    %1108 = vmatprep.subr.bf16.mxu0 0
    %1109 = vmatpush1.bf16.msra.mxu0 %v628
    %1110 = vmatprep.subr.bf16.mxu0 0
    %1111 = vmatpush1.bf16.msra.mxu0 %v629
    %1112 = vmatprep.subr.bf16.mxu0 0
    %1113 = vmatpush1.bf16.msra.mxu0 %v630
    %1114 = vmatprep.subr.bf16.mxu0 0
    %1115 = vmatpush1.bf16.msra.mxu0 %v631
    %1116 = vmatprep.subr.bf16.mxu0 0
    %1117 = vmatpush1.bf16.msra.mxu0 0
    %1118 = vmatprep.subr.bf16.mxu0 0
    %1119 = vmatpush1.bf16.msra.mxu0 0
    %1120 = vmatprep.subr.bf16.mxu0 0
    %1121 = vmatpush1.bf16.msra.mxu0 0
    %1122 = vmatprep.subr.bf16.mxu0 0
    %1123 = vmatpush1.bf16.msra.mxu0 0
    %1124 = vmatprep.subr.bf16.mxu0 0
    %1125 = vmatpush1.bf16.msra.mxu0 0
    %1126 = vmatprep.subr.bf16.mxu0 0
    %1127 = vmatpush1.bf16.msra.mxu0 0
    %1128 = vmatprep.subr.bf16.mxu0 0
    %1129 = vmatpush1.bf16.msra.mxu0 0
    %1130 = vmatprep.subr.bf16.mxu0 0
    %1131 = vmatpush1.bf16.msra.mxu0 0
    %1132 = vmatprep.mubr.bf16.mxu0 0
    %1133 = vmatmul.mubr.bf16.gmra.mrb[0].mxu0 %v1047
    %v1134 = vpop.f32.mrb[0].mxu0
    %v1135 = vadd.f32 0.0, %v1134
    %v1136 = vpop.f32.mrb[0].mxu0
    %v1137 = vpop.f32.mrb[0].mxu0
    %v1138 = vpop.f32.mrb[0].mxu0
    %1139 = vdwg.mxu0
    %v1140 = vadd.f32 %v1052, %v1135
    %v1141 = vmul.f32 %v1140, 0.5
    %v1142 = vtanh.pop %v1141
    %v1143 = vmul.f32 %v1142, 0.5
    %v1144 = vadd.f32 %v1143, 0.5
    %1145 = vmatprep.subr.bf16.mxu0 0
    %1146 = vmatpush1.bf16.msra.mxu0 %v717
    %1147 = vmatprep.subr.bf16.mxu0 0
    %1148 = vmatpush1.bf16.msra.mxu0 %v718
    %1149 = vmatprep.subr.bf16.mxu0 0
    %1150 = vmatpush1.bf16.msra.mxu0 %v719
    %1151 = vmatprep.subr.bf16.mxu0 0
    %1152 = vmatpush1.bf16.msra.mxu0 %v720
    %1153 = vmatprep.subr.bf16.mxu0 0
    %1154 = vmatpush1.bf16.msra.mxu0 %v721
    %1155 = vmatprep.subr.bf16.mxu0 0
    %1156 = vmatpush1.bf16.msra.mxu0 %v722
    %1157 = vmatprep.subr.bf16.mxu0 0
    %1158 = vmatpush1.bf16.msra.mxu0 %v723
    %1159 = vmatprep.subr.bf16.mxu0 0
    %1160 = vmatpush1.bf16.msra.mxu0 %v724
    %1161 = vmatprep.subr.bf16.mxu0 0
    %1162 = vmatpush1.bf16.msra.mxu0 0
    %1163 = vmatprep.subr.bf16.mxu0 0
    %1164 = vmatpush1.bf16.msra.mxu0 0
    %1165 = vmatprep.subr.bf16.mxu0 0
    %1166 = vmatpush1.bf16.msra.mxu0 0
    %1167 = vmatprep.subr.bf16.mxu0 0
    %1168 = vmatpush1.bf16.msra.mxu0 0
    %1169 = vmatprep.subr.bf16.mxu0 0
    %1170 = vmatpush1.bf16.msra.mxu0 0
    %1171 = vmatprep.subr.bf16.mxu0 0
    %1172 = vmatpush1.bf16.msra.mxu0 0
    %1173 = vmatprep.subr.bf16.mxu0 0
    %1174 = vmatpush1.bf16.msra.mxu0 0
    %1175 = vmatprep.subr.bf16.mxu0 0
    %1176 = vmatpush1.bf16.msra.mxu0 0
    %1177 = vmatprep.mubr.bf16.mxu0 0
    %1178 = vmatmul.mubr.bf16.gmra.mrb[0].mxu0 %v1047
    %v1179 = vpop.f32.mrb[0].mxu0
    %v1180 = vadd.f32 0.0, %v1179
    %v1181 = vpop.f32.mrb[0].mxu0
    %v1182 = vpop.f32.mrb[0].mxu0
    %v1183 = vpop.f32.mrb[0].mxu0
    %1184 = vdwg.mxu0
    %v1185 = vadd.f32 %v1053, %v1180
    %v1186 = vtanh.pop %v1185
    %1187 = vmatprep.subr.bf16.mxu0 0
    %1188 = vmatpush1.bf16.msra.mxu0 %v791
    %1189 = vmatprep.subr.bf16.mxu0 0
    %1190 = vmatpush1.bf16.msra.mxu0 %v792
    %1191 = vmatprep.subr.bf16.mxu0 0
    %1192 = vmatpush1.bf16.msra.mxu0 %v793
    %1193 = vmatprep.subr.bf16.mxu0 0
    %1194 = vmatpush1.bf16.msra.mxu0 %v794
    %1195 = vmatprep.subr.bf16.mxu0 0
    %1196 = vmatpush1.bf16.msra.mxu0 %v795
    %1197 = vmatprep.subr.bf16.mxu0 0
    %1198 = vmatpush1.bf16.msra.mxu0 %v796
    %1199 = vmatprep.subr.bf16.mxu0 0
    %1200 = vmatpush1.bf16.msra.mxu0 %v797
    %1201 = vmatprep.subr.bf16.mxu0 0
    %1202 = vmatpush1.bf16.msra.mxu0 %v798
    %1203 = vmatprep.subr.bf16.mxu0 0
    %1204 = vmatpush1.bf16.msra.mxu0 0
    %1205 = vmatprep.subr.bf16.mxu0 0
    %1206 = vmatpush1.bf16.msra.mxu0 0
    %1207 = vmatprep.subr.bf16.mxu0 0
    %1208 = vmatpush1.bf16.msra.mxu0 0
    %1209 = vmatprep.subr.bf16.mxu0 0
    %1210 = vmatpush1.bf16.msra.mxu0 0
    %1211 = vmatprep.subr.bf16.mxu0 0
    %1212 = vmatpush1.bf16.msra.mxu0 0
    %1213 = vmatprep.subr.bf16.mxu0 0
    %1214 = vmatpush1.bf16.msra.mxu0 0
    %1215 = vmatprep.subr.bf16.mxu0 0
    %1216 = vmatpush1.bf16.msra.mxu0 0
    %1217 = vmatprep.subr.bf16.mxu0 0
    %1218 = vmatpush1.bf16.msra.mxu0 0
    %1219 = vmatprep.mubr.bf16.mxu0 0
    %1220 = vmatmul.mubr.bf16.gmra.mrb[0].mxu0 %v1047
    %v1221 = vpop.f32.mrb[0].mxu0
    %v1222 = vadd.f32 0.0, %v1221
    %v1223 = vpop.f32.mrb[0].mxu0
    %v1224 = vpop.f32.mrb[0].mxu0
    %v1225 = vpop.f32.mrb[0].mxu0
    %1226 = vdwg.mxu0
    %v1227 = vadd.f32 %v1054, %v1222
    %v1228 = vmul.f32 %v1227, 0.5
    %v1229 = vtanh.pop %v1228
    %v1230 = vmul.f32 %v1229, 0.5
    %v1231 = vadd.f32 %v1230, 0.5
    %v1232 = vmul.f32 %v1144, %v1044
    %v1233 = vmul.f32 %v1099, %v1186
    %v1234 = vadd.f32 %v1232, %v1233
    %v1235 = vtanh.pop %v1234
    %v1236 = vmul.f32 %v1231, %v1235
    %v1237 = vpack.c.bf16 %v1236, %v1236
    %s1238 = smul.u32 3, 4
    %s1239 = smul.addr %s1238, 8
    %s1240 = scalar_lea.vmem [#allocation2], %s1239
    %v1241 = vld [vmem:[%s1240] sm:$0xff]
    %v1242 = vld [vmem:[%s1240 + $0x8] sm:$0xff]
    %v1243 = vld [vmem:[%s1240 + $0x10] sm:$0xff]
    %v1244 = vld [vmem:[%s1240 + $0x18] sm:$0xff]
    %1245 = vmatprep.subr.bf16.mxu0 0
    %1246 = vmatpush1.bf16.msra.mxu0 %v547
    %1247 = vmatprep.subr.bf16.mxu0 0
    %1248 = vmatpush1.bf16.msra.mxu0 %v548
    %1249 = vmatprep.subr.bf16.mxu0 0
    %1250 = vmatpush1.bf16.msra.mxu0 %v549
    %1251 = vmatprep.subr.bf16.mxu0 0
    %1252 = vmatpush1.bf16.msra.mxu0 %v550
    %1253 = vmatprep.subr.bf16.mxu0 0
    %1254 = vmatpush1.bf16.msra.mxu0 %v551
    %1255 = vmatprep.subr.bf16.mxu0 0
    %1256 = vmatpush1.bf16.msra.mxu0 %v552
    %1257 = vmatprep.subr.bf16.mxu0 0
    %1258 = vmatpush1.bf16.msra.mxu0 %v553
    %1259 = vmatprep.subr.bf16.mxu0 0
    %1260 = vmatpush1.bf16.msra.mxu0 %v554
    %1261 = vmatprep.subr.bf16.mxu0 0
    %1262 = vmatpush1.bf16.msra.mxu0 0
    %1263 = vmatprep.subr.bf16.mxu0 0
    %1264 = vmatpush1.bf16.msra.mxu0 0
    %1265 = vmatprep.subr.bf16.mxu0 0
    %1266 = vmatpush1.bf16.msra.mxu0 0
    %1267 = vmatprep.subr.bf16.mxu0 0
    %1268 = vmatpush1.bf16.msra.mxu0 0
    %1269 = vmatprep.subr.bf16.mxu0 0
    %1270 = vmatpush1.bf16.msra.mxu0 0
    %1271 = vmatprep.subr.bf16.mxu0 0
    %1272 = vmatpush1.bf16.msra.mxu0 0
    %1273 = vmatprep.subr.bf16.mxu0 0
    %1274 = vmatpush1.bf16.msra.mxu0 0
    %1275 = vmatprep.subr.bf16.mxu0 0
    %1276 = vmatpush1.bf16.msra.mxu0 0
    %1277 = vmatprep.mubr.bf16.mxu0 0
    %1278 = vmatmul.mubr.bf16.gmra.mrb[0].mxu0 %v1237
    %v1279 = vpop.f32.mrb[0].mxu0
    %v1280 = vadd.f32 0.0, %v1279
    %v1281 = vpop.f32.mrb[0].mxu0
    %v1282 = vpop.f32.mrb[0].mxu0
    %v1283 = vpop.f32.mrb[0].mxu0
    %1284 = vdwg.mxu0
    %v1285 = vadd.f32 %v1241, %v1280
    %v1286 = vmul.f32 %v1285, 0.5
    %v1287 = vtanh.pop %v1286
    %v1288 = vmul.f32 %v1287, 0.5
    %v1289 = vadd.f32 %v1288, 0.5
    %1290 = vmatprep.subr.bf16.mxu0 0
    %1291 = vmatpush1.bf16.msra.mxu0 %v624
    %1292 = vmatprep.subr.bf16.mxu0 0
    %1293 = vmatpush1.bf16.msra.mxu0 %v625
    %1294 = vmatprep.subr.bf16.mxu0 0
    %1295 = vmatpush1.bf16.msra.mxu0 %v626
    %1296 = vmatprep.subr.bf16.mxu0 0
    %1297 = vmatpush1.bf16.msra.mxu0 %v627
    %1298 = vmatprep.subr.bf16.mxu0 0
    %1299 = vmatpush1.bf16.msra.mxu0 %v628
    %1300 = vmatprep.subr.bf16.mxu0 0
    %1301 = vmatpush1.bf16.msra.mxu0 %v629
    %1302 = vmatprep.subr.bf16.mxu0 0
    %1303 = vmatpush1.bf16.msra.mxu0 %v630
    %1304 = vmatprep.subr.bf16.mxu0 0
    %1305 = vmatpush1.bf16.msra.mxu0 %v631
    %1306 = vmatprep.subr.bf16.mxu0 0
    %1307 = vmatpush1.bf16.msra.mxu0 0
    %1308 = vmatprep.subr.bf16.mxu0 0
    %1309 = vmatpush1.bf16.msra.mxu0 0
    %1310 = vmatprep.subr.bf16.mxu0 0
    %1311 = vmatpush1.bf16.msra.mxu0 0
    %1312 = vmatprep.subr.bf16.mxu0 0
    %1313 = vmatpush1.bf16.msra.mxu0 0
    %1314 = vmatprep.subr.bf16.mxu0 0
    %1315 = vmatpush1.bf16.msra.mxu0 0
    %1316 = vmatprep.subr.bf16.mxu0 0
    %1317 = vmatpush1.bf16.msra.mxu0 0
    %1318 = vmatprep.subr.bf16.mxu0 0
    %1319 = vmatpush1.bf16.msra.mxu0 0
    %1320 = vmatprep.subr.bf16.mxu0 0
    %1321 = vmatpush1.bf16.msra.mxu0 0
    %1322 = vmatprep.mubr.bf16.mxu0 0
    %1323 = vmatmul.mubr.bf16.gmra.mrb[0].mxu0 %v1237
    %v1324 = vpop.f32.mrb[0].mxu0
    %v1325 = vadd.f32 0.0, %v1324
    %v1326 = vpop.f32.mrb[0].mxu0
    %v1327 = vpop.f32.mrb[0].mxu0
    %v1328 = vpop.f32.mrb[0].mxu0
    %1329 = vdwg.mxu0
    %v1330 = vadd.f32 %v1242, %v1325
    %v1331 = vmul.f32 %v1330, 0.5
    %v1332 = vtanh.pop %v1331
    %v1333 = vmul.f32 %v1332, 0.5
    %v1334 = vadd.f32 %v1333, 0.5
    %1335 = vmatprep.subr.bf16.mxu0 0
    %1336 = vmatpush1.bf16.msra.mxu0 %v717
    %1337 = vmatprep.subr.bf16.mxu0 0
    %1338 = vmatpush1.bf16.msra.mxu0 %v718
    %1339 = vmatprep.subr.bf16.mxu0 0
    %1340 = vmatpush1.bf16.msra.mxu0 %v719
    %1341 = vmatprep.subr.bf16.mxu0 0
    %1342 = vmatpush1.bf16.msra.mxu0 %v720
    %1343 = vmatprep.subr.bf16.mxu0 0
    %1344 = vmatpush1.bf16.msra.mxu0 %v721
    %1345 = vmatprep.subr.bf16.mxu0 0
    %1346 = vmatpush1.bf16.msra.mxu0 %v722
    %1347 = vmatprep.subr.bf16.mxu0 0
    %1348 = vmatpush1.bf16.msra.mxu0 %v723
    %1349 = vmatprep.subr.bf16.mxu0 0
    %1350 = vmatpush1.bf16.msra.mxu0 %v724
    %1351 = vmatprep.subr.bf16.mxu0 0
    %1352 = vmatpush1.bf16.msra.mxu0 0
    %1353 = vmatprep.subr.bf16.mxu0 0
    %1354 = vmatpush1.bf16.msra.mxu0 0
    %1355 = vmatprep.subr.bf16.mxu0 0
    %1356 = vmatpush1.bf16.msra.mxu0 0
    %1357 = vmatprep.subr.bf16.mxu0 0
    %1358 = vmatpush1.bf16.msra.mxu0 0
    %1359 = vmatprep.subr.bf16.mxu0 0
    %1360 = vmatpush1.bf16.msra.mxu0 0
    %1361 = vmatprep.subr.bf16.mxu0 0
    %1362 = vmatpush1.bf16.msra.mxu0 0
    %1363 = vmatprep.subr.bf16.mxu0 0
    %1364 = vmatpush1.bf16.msra.mxu0 0
    %1365 = vmatprep.subr.bf16.mxu0 0
    %1366 = vmatpush1.bf16.msra.mxu0 0
    %1367 = vmatprep.mubr.bf16.mxu0 0
    %1368 = vmatmul.mubr.bf16.gmra.mrb[0].mxu0 %v1237
    %v1369 = vpop.f32.mrb[0].mxu0
    %v1370 = vadd.f32 0.0, %v1369
    %v1371 = vpop.f32.mrb[0].mxu0
    %v1372 = vpop.f32.mrb[0].mxu0
    %v1373 = vpop.f32.mrb[0].mxu0
    %1374 = vdwg.mxu0
    %v1375 = vadd.f32 %v1243, %v1370
    %v1376 = vtanh.pop %v1375
    %1377 = vmatprep.subr.bf16.mxu0 0
    %1378 = vmatpush1.bf16.msra.mxu0 %v791
    %1379 = vmatprep.subr.bf16.mxu0 0
    %1380 = vmatpush1.bf16.msra.mxu0 %v792
    %1381 = vmatprep.subr.bf16.mxu0 0
    %1382 = vmatpush1.bf16.msra.mxu0 %v793
    %1383 = vmatprep.subr.bf16.mxu0 0
    %1384 = vmatpush1.bf16.msra.mxu0 %v794
    %1385 = vmatprep.subr.bf16.mxu0 0
    %1386 = vmatpush1.bf16.msra.mxu0 %v795
    %1387 = vmatprep.subr.bf16.mxu0 0
    %1388 = vmatpush1.bf16.msra.mxu0 %v796
    %1389 = vmatprep.subr.bf16.mxu0 0
    %1390 = vmatpush1.bf16.msra.mxu0 %v797
    %1391 = vmatprep.subr.bf16.mxu0 0
    %1392 = vmatpush1.bf16.msra.mxu0 %v798
    %1393 = vmatprep.subr.bf16.mxu0 0
    %1394 = vmatpush1.bf16.msra.mxu0 0
    %1395 = vmatprep.subr.bf16.mxu0 0
    %1396 = vmatpush1.bf16.msra.mxu0 0
    %1397 = vmatprep.subr.bf16.mxu0 0
    %1398 = vmatpush1.bf16.msra.mxu0 0
    %1399 = vmatprep.subr.bf16.mxu0 0
    %1400 = vmatpush1.bf16.msra.mxu0 0
    %1401 = vmatprep.subr.bf16.mxu0 0
    %1402 = vmatpush1.bf16.msra.mxu0 0
    %1403 = vmatprep.subr.bf16.mxu0 0
    %1404 = vmatpush1.bf16.msra.mxu0 0
    %1405 = vmatprep.subr.bf16.mxu0 0
    %1406 = vmatpush1.bf16.msra.mxu0 0
    %1407 = vmatprep.subr.bf16.mxu0 0
    %1408 = vmatpush1.bf16.msra.mxu0 0
    %1409 = vmatprep.mubr.bf16.mxu0 0
    %1410 = vmatmul.mubr.bf16.gmra.mrb[0].mxu0 %v1237
    %v1411 = vpop.f32.mrb[0].mxu0
    %v1412 = vadd.f32 0.0, %v1411
    %v1413 = vpop.f32.mrb[0].mxu0
    %v1414 = vpop.f32.mrb[0].mxu0
    %v1415 = vpop.f32.mrb[0].mxu0
    %1416 = vdwg.mxu0
    %v1417 = vadd.f32 %v1244, %v1412
    %v1418 = vmul.f32 %v1417, 0.5
    %v1419 = vtanh.pop %v1418
    %v1420 = vmul.f32 %v1419, 0.5
    %v1421 = vadd.f32 %v1420, 0.5
    %v1422 = vmul.f32 %v1334, %v1234
    %v1423 = vmul.f32 %v1289, %v1376
    %v1424 = vadd.f32 %v1422, %v1423
    %v1425 = vtanh.pop %v1424
    %v1426 = vmul.f32 %v1421, %v1425
    %v1427 = vpack.c.bf16 %v1426, %v1426
    %s1428 = smul.u32 4, 4
    %s1429 = smul.addr %s1428, 8
    %s1430 = scalar_lea.vmem [#allocation2], %s1429
    %v1431 = vld [vmem:[%s1430] sm:$0xff]
    %v1432 = vld [vmem:[%s1430 + $0x8] sm:$0xff]
    %v1433 = vld [vmem:[%s1430 + $0x10] sm:$0xff]
    %v1434 = vld [vmem:[%s1430 + $0x18] sm:$0xff]
    %1435 = vmatprep.subr.bf16.mxu0 0
    %1436 = vmatpush1.bf16.msra.mxu0 %v547
    %1437 = vmatprep.subr.bf16.mxu0 0
    %1438 = vmatpush1.bf16.msra.mxu0 %v548
    %1439 = vmatprep.subr.bf16.mxu0 0
    %1440 = vmatpush1.bf16.msra.mxu0 %v549
    %1441 = vmatprep.subr.bf16.mxu0 0
    %1442 = vmatpush1.bf16.msra.mxu0 %v550
    %1443 = vmatprep.subr.bf16.mxu0 0
    %1444 = vmatpush1.bf16.msra.mxu0 %v551
    %1445 = vmatprep.subr.bf16.mxu0 0
    %1446 = vmatpush1.bf16.msra.mxu0 %v552
    %1447 = vmatprep.subr.bf16.mxu0 0
    %1448 = vmatpush1.bf16.msra.mxu0 %v553
    %1449 = vmatprep.subr.bf16.mxu0 0
    %1450 = vmatpush1.bf16.msra.mxu0 %v554
    %1451 = vmatprep.subr.bf16.mxu0 0
    %1452 = vmatpush1.bf16.msra.mxu0 0
    %1453 = vmatprep.subr.bf16.mxu0 0
    %1454 = vmatpush1.bf16.msra.mxu0 0
    %1455 = vmatprep.subr.bf16.mxu0 0
    %1456 = vmatpush1.bf16.msra.mxu0 0
    %1457 = vmatprep.subr.bf16.mxu0 0
    %1458 = vmatpush1.bf16.msra.mxu0 0
    %1459 = vmatprep.subr.bf16.mxu0 0
    %1460 = vmatpush1.bf16.msra.mxu0 0
    %1461 = vmatprep.subr.bf16.mxu0 0
    %1462 = vmatpush1.bf16.msra.mxu0 0
    %1463 = vmatprep.subr.bf16.mxu0 0
    %1464 = vmatpush1.bf16.msra.mxu0 0
    %1465 = vmatprep.subr.bf16.mxu0 0
    %1466 = vmatpush1.bf16.msra.mxu0 0
    %1467 = vmatprep.mubr.bf16.mxu0 0
    %1468 = vmatmul.mubr.bf16.gmra.mrb[0].mxu0 %v1427
    %v1469 = vpop.f32.mrb[0].mxu0
    %v1470 = vadd.f32 0.0, %v1469
    %v1471 = vpop.f32.mrb[0].mxu0
    %v1472 = vpop.f32.mrb[0].mxu0
    %v1473 = vpop.f32.mrb[0].mxu0
    %1474 = vdwg.mxu0
    %v1475 = vadd.f32 %v1431, %v1470
    %v1476 = vmul.f32 %v1475, 0.5
    %v1477 = vtanh.pop %v1476
    %v1478 = vmul.f32 %v1477, 0.5
    %v1479 = vadd.f32 %v1478, 0.5
    %1480 = vmatprep.subr.bf16.mxu0 0
    %1481 = vmatpush1.bf16.msra.mxu0 %v624
    %1482 = vmatprep.subr.bf16.mxu0 0
    %1483 = vmatpush1.bf16.msra.mxu0 %v625
    %1484 = vmatprep.subr.bf16.mxu0 0
    %1485 = vmatpush1.bf16.msra.mxu0 %v626
    %1486 = vmatprep.subr.bf16.mxu0 0
    %1487 = vmatpush1.bf16.msra.mxu0 %v627
    %1488 = vmatprep.subr.bf16.mxu0 0
    %1489 = vmatpush1.bf16.msra.mxu0 %v628
    %1490 = vmatprep.subr.bf16.mxu0 0
    %1491 = vmatpush1.bf16.msra.mxu0 %v629
    %1492 = vmatprep.subr.bf16.mxu0 0
    %1493 = vmatpush1.bf16.msra.mxu0 %v630
    %1494 = vmatprep.subr.bf16.mxu0 0
    %1495 = vmatpush1.bf16.msra.mxu0 %v631
    %1496 = vmatprep.subr.bf16.mxu0 0
    %1497 = vmatpush1.bf16.msra.mxu0 0
    %1498 = vmatprep.subr.bf16.mxu0 0
    %1499 = vmatpush1.bf16.msra.mxu0 0
    %1500 = vmatprep.subr.bf16.mxu0 0
    %1501 = vmatpush1.bf16.msra.mxu0 0
    %1502 = vmatprep.subr.bf16.mxu0 0
    %1503 = vmatpush1.bf16.msra.mxu0 0
    %1504 = vmatprep.subr.bf16.mxu0 0
    %1505 = vmatpush1.bf16.msra.mxu0 0
    %1506 = vmatprep.subr.bf16.mxu0 0
    %1507 = vmatpush1.bf16.msra.mxu0 0
    %1508 = vmatprep.subr.bf16.mxu0 0
    %1509 = vmatpush1.bf16.msra.mxu0 0
    %1510 = vmatprep.subr.bf16.mxu0 0
    %1511 = vmatpush1.bf16.msra.mxu0 0
    %1512 = vmatprep.mubr.bf16.mxu0 0
    %1513 = vmatmul.mubr.bf16.gmra.mrb[0].mxu0 %v1427
    %v1514 = vpop.f32.mrb[0].mxu0
    %v1515 = vadd.f32 0.0, %v1514
    %v1516 = vpop.f32.mrb[0].mxu0
    %v1517 = vpop.f32.mrb[0].mxu0
    %v1518 = vpop.f32.mrb[0].mxu0
    %1519 = vdwg.mxu0
    %v1520 = vadd.f32 %v1432, %v1515
    %v1521 = vmul.f32 %v1520, 0.5
    %v1522 = vtanh.pop %v1521
    %v1523 = vmul.f32 %v1522, 0.5
    %v1524 = vadd.f32 %v1523, 0.5
    %1525 = vmatprep.subr.bf16.mxu0 0
    %1526 = vmatpush1.bf16.msra.mxu0 %v717
    %1527 = vmatprep.subr.bf16.mxu0 0
    %1528 = vmatpush1.bf16.msra.mxu0 %v718
    %1529 = vmatprep.subr.bf16.mxu0 0
    %1530 = vmatpush1.bf16.msra.mxu0 %v719
    %1531 = vmatprep.subr.bf16.mxu0 0
    %1532 = vmatpush1.bf16.msra.mxu0 %v720
    %1533 = vmatprep.subr.bf16.mxu0 0
    %1534 = vmatpush1.bf16.msra.mxu0 %v721
    %1535 = vmatprep.subr.bf16.mxu0 0
    %1536 = vmatpush1.bf16.msra.mxu0 %v722
    %1537 = vmatprep.subr.bf16.mxu0 0
    %1538 = vmatpush1.bf16.msra.mxu0 %v723
    %1539 = vmatprep.subr.bf16.mxu0 0
    %1540 = vmatpush1.bf16.msra.mxu0 %v724
    %1541 = vmatprep.subr.bf16.mxu0 0
    %1542 = vmatpush1.bf16.msra.mxu0 0
    %1543 = vmatprep.subr.bf16.mxu0 0
    %1544 = vmatpush1.bf16.msra.mxu0 0
    %1545 = vmatprep.subr.bf16.mxu0 0
    %1546 = vmatpush1.bf16.msra.mxu0 0
    %1547 = vmatprep.subr.bf16.mxu0 0
    %1548 = vmatpush1.bf16.msra.mxu0 0
    %1549 = vmatprep.subr.bf16.mxu0 0
    %1550 = vmatpush1.bf16.msra.mxu0 0
    %1551 = vmatprep.subr.bf16.mxu0 0
    %1552 = vmatpush1.bf16.msra.mxu0 0
    %1553 = vmatprep.subr.bf16.mxu0 0
    %1554 = vmatpush1.bf16.msra.mxu0 0
    %1555 = vmatprep.subr.bf16.mxu0 0
    %1556 = vmatpush1.bf16.msra.mxu0 0
    %1557 = vmatprep.mubr.bf16.mxu0 0
    %1558 = vmatmul.mubr.bf16.gmra.mrb[0].mxu0 %v1427
    %v1559 = vpop.f32.mrb[0].mxu0
    %v1560 = vadd.f32 0.0, %v1559
    %v1561 = vpop.f32.mrb[0].mxu0
    %v1562 = vpop.f32.mrb[0].mxu0
    %v1563 = vpop.f32.mrb[0].mxu0
    %1564 = vdwg.mxu0
    %v1565 = vadd.f32 %v1433, %v1560
    %v1566 = vtanh.pop %v1565
    %1567 = vmatprep.subr.bf16.mxu0 0
    %1568 = vmatpush1.bf16.msra.mxu0 %v791
    %1569 = vmatprep.subr.bf16.mxu0 0
    %1570 = vmatpush1.bf16.msra.mxu0 %v792
    %1571 = vmatprep.subr.bf16.mxu0 0
    %1572 = vmatpush1.bf16.msra.mxu0 %v793
    %1573 = vmatprep.subr.bf16.mxu0 0
    %1574 = vmatpush1.bf16.msra.mxu0 %v794
    %1575 = vmatprep.subr.bf16.mxu0 0
    %1576 = vmatpush1.bf16.msra.mxu0 %v795
    %1577 = vmatprep.subr.bf16.mxu0 0
    %1578 = vmatpush1.bf16.msra.mxu0 %v796
    %1579 = vmatprep.subr.bf16.mxu0 0
    %1580 = vmatpush1.bf16.msra.mxu0 %v797
    %1581 = vmatprep.subr.bf16.mxu0 0
    %1582 = vmatpush1.bf16.msra.mxu0 %v798
    %1583 = vmatprep.subr.bf16.mxu0 0
    %1584 = vmatpush1.bf16.msra.mxu0 0
    %1585 = vmatprep.subr.bf16.mxu0 0
    %1586 = vmatpush1.bf16.msra.mxu0 0
    %1587 = vmatprep.subr.bf16.mxu0 0
    %1588 = vmatpush1.bf16.msra.mxu0 0
    %1589 = vmatprep.subr.bf16.mxu0 0
    %1590 = vmatpush1.bf16.msra.mxu0 0
    %1591 = vmatprep.subr.bf16.mxu0 0
    %1592 = vmatpush1.bf16.msra.mxu0 0
    %1593 = vmatprep.subr.bf16.mxu0 0
    %1594 = vmatpush1.bf16.msra.mxu0 0
    %1595 = vmatprep.subr.bf16.mxu0 0
    %1596 = vmatpush1.bf16.msra.mxu0 0
    %1597 = vmatprep.subr.bf16.mxu0 0
    %1598 = vmatpush1.bf16.msra.mxu0 0
    %1599 = vmatprep.mubr.bf16.mxu0 0
    %1600 = vmatmul.mubr.bf16.gmra.mrb[0].mxu0 %v1427
    %v1601 = vpop.f32.mrb[0].mxu0
    %v1602 = vadd.f32 0.0, %v1601
    %v1603 = vpop.f32.mrb[0].mxu0
    %v1604 = vpop.f32.mrb[0].mxu0
    %v1605 = vpop.f32.mrb[0].mxu0
    %1606 = vdwg.mxu0
    %v1607 = vadd.f32 %v1434, %v1602
    %v1608 = vmul.f32 %v1607, 0.5
    %v1609 = vtanh.pop %v1608
    %v1610 = vmul.f32 %v1609, 0.5
    %v1611 = vadd.f32 %v1610, 0.5
    %v1612 = vmul.f32 %v1524, %v1424
    %v1613 = vmul.f32 %v1479, %v1566
    %v1614 = vadd.f32 %v1612, %v1613
    %v1615 = vtanh.pop %v1614
    %v1616 = vmul.f32 %v1611, %v1615
    %v1617 = vpack.c.bf16 %v1616, %v1616
    %s1618 = smul.u32 5, 4
    %s1619 = smul.addr %s1618, 8
    %s1620 = scalar_lea.vmem [#allocation2], %s1619
    %v1621 = vld [vmem:[%s1620] sm:$0xff]
    %v1622 = vld [vmem:[%s1620 + $0x8] sm:$0xff]
    %v1623 = vld [vmem:[%s1620 + $0x10] sm:$0xff]
    %v1624 = vld [vmem:[%s1620 + $0x18] sm:$0xff]
    %1625 = vmatprep.subr.bf16.mxu0 0
    %1626 = vmatpush1.bf16.msra.mxu0 %v547
    %1627 = vmatprep.subr.bf16.mxu0 0
    %1628 = vmatpush1.bf16.msra.mxu0 %v548
    %1629 = vmatprep.subr.bf16.mxu0 0
    %1630 = vmatpush1.bf16.msra.mxu0 %v549
    %1631 = vmatprep.subr.bf16.mxu0 0
    %1632 = vmatpush1.bf16.msra.mxu0 %v550
    %1633 = vmatprep.subr.bf16.mxu0 0
    %1634 = vmatpush1.bf16.msra.mxu0 %v551
    %1635 = vmatprep.subr.bf16.mxu0 0
    %1636 = vmatpush1.bf16.msra.mxu0 %v552
    %1637 = vmatprep.subr.bf16.mxu0 0
    %1638 = vmatpush1.bf16.msra.mxu0 %v553
    %1639 = vmatprep.subr.bf16.mxu0 0
    %1640 = vmatpush1.bf16.msra.mxu0 %v554
    %1641 = vmatprep.subr.bf16.mxu0 0
    %1642 = vmatpush1.bf16.msra.mxu0 0
    %1643 = vmatprep.subr.bf16.mxu0 0
    %1644 = vmatpush1.bf16.msra.mxu0 0
    %1645 = vmatprep.subr.bf16.mxu0 0
    %1646 = vmatpush1.bf16.msra.mxu0 0
    %1647 = vmatprep.subr.bf16.mxu0 0
    %1648 = vmatpush1.bf16.msra.mxu0 0
    %1649 = vmatprep.subr.bf16.mxu0 0
    %1650 = vmatpush1.bf16.msra.mxu0 0
    %1651 = vmatprep.subr.bf16.mxu0 0
    %1652 = vmatpush1.bf16.msra.mxu0 0
    %1653 = vmatprep.subr.bf16.mxu0 0
    %1654 = vmatpush1.bf16.msra.mxu0 0
    %1655 = vmatprep.subr.bf16.mxu0 0
    %1656 = vmatpush1.bf16.msra.mxu0 0
    %1657 = vmatprep.mubr.bf16.mxu0 0
    %1658 = vmatmul.mubr.bf16.gmra.mrb[0].mxu0 %v1617
    %v1659 = vpop.f32.mrb[0].mxu0
    %v1660 = vadd.f32 0.0, %v1659
    %v1661 = vpop.f32.mrb[0].mxu0
    %v1662 = vpop.f32.mrb[0].mxu0
    %v1663 = vpop.f32.mrb[0].mxu0
    %1664 = vdwg.mxu0
    %v1665 = vadd.f32 %v1621, %v1660
    %v1666 = vmul.f32 %v1665, 0.5
    %v1667 = vtanh.pop %v1666
    %v1668 = vmul.f32 %v1667, 0.5
    %v1669 = vadd.f32 %v1668, 0.5
    %1670 = vmatprep.subr.bf16.mxu0 0
    %1671 = vmatpush1.bf16.msra.mxu0 %v624
    %1672 = vmatprep.subr.bf16.mxu0 0
    %1673 = vmatpush1.bf16.msra.mxu0 %v625
    %1674 = vmatprep.subr.bf16.mxu0 0
    %1675 = vmatpush1.bf16.msra.mxu0 %v626
    %1676 = vmatprep.subr.bf16.mxu0 0
    %1677 = vmatpush1.bf16.msra.mxu0 %v627
    %1678 = vmatprep.subr.bf16.mxu0 0
    %1679 = vmatpush1.bf16.msra.mxu0 %v628
    %1680 = vmatprep.subr.bf16.mxu0 0
    %1681 = vmatpush1.bf16.msra.mxu0 %v629
    %1682 = vmatprep.subr.bf16.mxu0 0
    %1683 = vmatpush1.bf16.msra.mxu0 %v630
    %1684 = vmatprep.subr.bf16.mxu0 0
    %1685 = vmatpush1.bf16.msra.mxu0 %v631
    %1686 = vmatprep.subr.bf16.mxu0 0
    %1687 = vmatpush1.bf16.msra.mxu0 0
    %1688 = vmatprep.subr.bf16.mxu0 0
    %1689 = vmatpush1.bf16.msra.mxu0 0
    %1690 = vmatprep.subr.bf16.mxu0 0
    %1691 = vmatpush1.bf16.msra.mxu0 0
    %1692 = vmatprep.subr.bf16.mxu0 0
    %1693 = vmatpush1.bf16.msra.mxu0 0
    %1694 = vmatprep.subr.bf16.mxu0 0
    %1695 = vmatpush1.bf16.msra.mxu0 0
    %1696 = vmatprep.subr.bf16.mxu0 0
    %1697 = vmatpush1.bf16.msra.mxu0 0
    %1698 = vmatprep.subr.bf16.mxu0 0
    %1699 = vmatpush1.bf16.msra.mxu0 0
    %1700 = vmatprep.subr.bf16.mxu0 0
    %1701 = vmatpush1.bf16.msra.mxu0 0
    %1702 = vmatprep.mubr.bf16.mxu0 0
    %1703 = vmatmul.mubr.bf16.gmra.mrb[0].mxu0 %v1617
    %v1704 = vpop.f32.mrb[0].mxu0
    %v1705 = vadd.f32 0.0, %v1704
    %v1706 = vpop.f32.mrb[0].mxu0
    %v1707 = vpop.f32.mrb[0].mxu0
    %v1708 = vpop.f32.mrb[0].mxu0
    %1709 = vdwg.mxu0
    %v1710 = vadd.f32 %v1622, %v1705
    %v1711 = vmul.f32 %v1710, 0.5
    %v1712 = vtanh.pop %v1711
    %v1713 = vmul.f32 %v1712, 0.5
    %v1714 = vadd.f32 %v1713, 0.5
    %1715 = vmatprep.subr.bf16.mxu0 0
    %1716 = vmatpush1.bf16.msra.mxu0 %v717
    %1717 = vmatprep.subr.bf16.mxu0 0
    %1718 = vmatpush1.bf16.msra.mxu0 %v718
    %1719 = vmatprep.subr.bf16.mxu0 0
    %1720 = vmatpush1.bf16.msra.mxu0 %v719
    %1721 = vmatprep.subr.bf16.mxu0 0
    %1722 = vmatpush1.bf16.msra.mxu0 %v720
    %1723 = vmatprep.subr.bf16.mxu0 0
    %1724 = vmatpush1.bf16.msra.mxu0 %v721
    %1725 = vmatprep.subr.bf16.mxu0 0
    %1726 = vmatpush1.bf16.msra.mxu0 %v722
    %1727 = vmatprep.subr.bf16.mxu0 0
    %1728 = vmatpush1.bf16.msra.mxu0 %v723
    %1729 = vmatprep.subr.bf16.mxu0 0
    %1730 = vmatpush1.bf16.msra.mxu0 %v724
    %1731 = vmatprep.subr.bf16.mxu0 0
    %1732 = vmatpush1.bf16.msra.mxu0 0
    %1733 = vmatprep.subr.bf16.mxu0 0
    %1734 = vmatpush1.bf16.msra.mxu0 0
    %1735 = vmatprep.subr.bf16.mxu0 0
    %1736 = vmatpush1.bf16.msra.mxu0 0
    %1737 = vmatprep.subr.bf16.mxu0 0
    %1738 = vmatpush1.bf16.msra.mxu0 0
    %1739 = vmatprep.subr.bf16.mxu0 0
    %1740 = vmatpush1.bf16.msra.mxu0 0
    %1741 = vmatprep.subr.bf16.mxu0 0
    %1742 = vmatpush1.bf16.msra.mxu0 0
    %1743 = vmatprep.subr.bf16.mxu0 0
    %1744 = vmatpush1.bf16.msra.mxu0 0
    %1745 = vmatprep.subr.bf16.mxu0 0
    %1746 = vmatpush1.bf16.msra.mxu0 0
    %1747 = vmatprep.mubr.bf16.mxu0 0
    %1748 = vmatmul.mubr.bf16.gmra.mrb[0].mxu0 %v1617
    %v1749 = vpop.f32.mrb[0].mxu0
    %v1750 = vadd.f32 0.0, %v1749
    %v1751 = vpop.f32.mrb[0].mxu0
    %v1752 = vpop.f32.mrb[0].mxu0
    %v1753 = vpop.f32.mrb[0].mxu0
    %1754 = vdwg.mxu0
    %v1755 = vadd.f32 %v1623, %v1750
    %v1756 = vtanh.pop %v1755
    %1757 = vmatprep.subr.bf16.mxu0 0
    %1758 = vmatpush1.bf16.msra.mxu0 %v791
    %1759 = vmatprep.subr.bf16.mxu0 0
    %1760 = vmatpush1.bf16.msra.mxu0 %v792
    %1761 = vmatprep.subr.bf16.mxu0 0
    %1762 = vmatpush1.bf16.msra.mxu0 %v793
    %1763 = vmatprep.subr.bf16.mxu0 0
    %1764 = vmatpush1.bf16.msra.mxu0 %v794
    %1765 = vmatprep.subr.bf16.mxu0 0
    %1766 = vmatpush1.bf16.msra.mxu0 %v795
    %1767 = vmatprep.subr.bf16.mxu0 0
    %1768 = vmatpush1.bf16.msra.mxu0 %v796
    %1769 = vmatprep.subr.bf16.mxu0 0
    %1770 = vmatpush1.bf16.msra.mxu0 %v797
    %1771 = vmatprep.subr.bf16.mxu0 0
    %1772 = vmatpush1.bf16.msra.mxu0 %v798
    %1773 = vmatprep.subr.bf16.mxu0 0
    %1774 = vmatpush1.bf16.msra.mxu0 0
    %1775 = vmatprep.subr.bf16.mxu0 0
    %1776 = vmatpush1.bf16.msra.mxu0 0
    %1777 = vmatprep.subr.bf16.mxu0 0
    %1778 = vmatpush1.bf16.msra.mxu0 0
    %1779 = vmatprep.subr.bf16.mxu0 0
    %1780 = vmatpush1.bf16.msra.mxu0 0
    %1781 = vmatprep.subr.bf16.mxu0 0
    %1782 = vmatpush1.bf16.msra.mxu0 0
    %1783 = vmatprep.subr.bf16.mxu0 0
    %1784 = vmatpush1.bf16.msra.mxu0 0
    %1785 = vmatprep.subr.bf16.mxu0 0
    %1786 = vmatpush1.bf16.msra.mxu0 0
    %1787 = vmatprep.subr.bf16.mxu0 0
    %1788 = vmatpush1.bf16.msra.mxu0 0
    %1789 = vmatprep.mubr.bf16.mxu0 0
    %1790 = vmatmul.mubr.bf16.gmra.mrb[0].mxu0 %v1617
    %v1791 = vpop.f32.mrb[0].mxu0
    %v1792 = vadd.f32 0.0, %v1791
    %v1793 = vpop.f32.mrb[0].mxu0
    %v1794 = vpop.f32.mrb[0].mxu0
    %v1795 = vpop.f32.mrb[0].mxu0
    %1796 = vdwg.mxu0
    %v1797 = vadd.f32 %v1624, %v1792
    %v1798 = vmul.f32 %v1797, 0.5
    %v1799 = vtanh.pop %v1798
    %v1800 = vmul.f32 %v1799, 0.5
    %v1801 = vadd.f32 %v1800, 0.5
    %v1802 = vmul.f32 %v1714, %v1614
    %v1803 = vmul.f32 %v1669, %v1756
    %v1804 = vadd.f32 %v1802, %v1803
    %v1805 = vtanh.pop %v1804
    %v1806 = vmul.f32 %v1801, %v1805
    %v1807 = vpack.c.bf16 %v1806, %v1806
    %s1808 = smul.u32 6, 4
    %s1809 = smul.addr %s1808, 8
    %s1810 = scalar_lea.vmem [#allocation2], %s1809
    %v1811 = vld [vmem:[%s1810] sm:$0xff]
    %v1812 = vld [vmem:[%s1810 + $0x8] sm:$0xff]
    %v1813 = vld [vmem:[%s1810 + $0x10] sm:$0xff]
    %v1814 = vld [vmem:[%s1810 + $0x18] sm:$0xff]
    %1815 = vmatprep.subr.bf16.mxu0 0
    %1816 = vmatpush1.bf16.msra.mxu0 %v547
    %1817 = vmatprep.subr.bf16.mxu0 0
    %1818 = vmatpush1.bf16.msra.mxu0 %v548
    %1819 = vmatprep.subr.bf16.mxu0 0
    %1820 = vmatpush1.bf16.msra.mxu0 %v549
    %1821 = vmatprep.subr.bf16.mxu0 0
    %1822 = vmatpush1.bf16.msra.mxu0 %v550
    %1823 = vmatprep.subr.bf16.mxu0 0
    %1824 = vmatpush1.bf16.msra.mxu0 %v551
    %1825 = vmatprep.subr.bf16.mxu0 0
    %1826 = vmatpush1.bf16.msra.mxu0 %v552
    %1827 = vmatprep.subr.bf16.mxu0 0
    %1828 = vmatpush1.bf16.msra.mxu0 %v553
    %1829 = vmatprep.subr.bf16.mxu0 0
    %1830 = vmatpush1.bf16.msra.mxu0 %v554
    %1831 = vmatprep.subr.bf16.mxu0 0
    %1832 = vmatpush1.bf16.msra.mxu0 0
    %1833 = vmatprep.subr.bf16.mxu0 0
    %1834 = vmatpush1.bf16.msra.mxu0 0
    %1835 = vmatprep.subr.bf16.mxu0 0
    %1836 = vmatpush1.bf16.msra.mxu0 0
    %1837 = vmatprep.subr.bf16.mxu0 0
    %1838 = vmatpush1.bf16.msra.mxu0 0
    %1839 = vmatprep.subr.bf16.mxu0 0
    %1840 = vmatpush1.bf16.msra.mxu0 0
    %1841 = vmatprep.subr.bf16.mxu0 0
    %1842 = vmatpush1.bf16.msra.mxu0 0
    %1843 = vmatprep.subr.bf16.mxu0 0
    %1844 = vmatpush1.bf16.msra.mxu0 0
    %1845 = vmatprep.subr.bf16.mxu0 0
    %1846 = vmatpush1.bf16.msra.mxu0 0
    %1847 = vmatprep.mubr.bf16.mxu0 0
    %1848 = vmatmul.mubr.bf16.gmra.mrb[0].mxu0 %v1807
    %v1849 = vpop.f32.mrb[0].mxu0
    %v1850 = vadd.f32 0.0, %v1849
    %v1851 = vpop.f32.mrb[0].mxu0
    %v1852 = vpop.f32.mrb[0].mxu0
    %v1853 = vpop.f32.mrb[0].mxu0
    %1854 = vdwg.mxu0
    %v1855 = vadd.f32 %v1811, %v1850
    %v1856 = vmul.f32 %v1855, 0.5
    %v1857 = vtanh.pop %v1856
    %v1858 = vmul.f32 %v1857, 0.5
    %v1859 = vadd.f32 %v1858, 0.5
    %1860 = vmatprep.subr.bf16.mxu0 0
    %1861 = vmatpush1.bf16.msra.mxu0 %v624
    %1862 = vmatprep.subr.bf16.mxu0 0
    %1863 = vmatpush1.bf16.msra.mxu0 %v625
    %1864 = vmatprep.subr.bf16.mxu0 0
    %1865 = vmatpush1.bf16.msra.mxu0 %v626
    %1866 = vmatprep.subr.bf16.mxu0 0
    %1867 = vmatpush1.bf16.msra.mxu0 %v627
    %1868 = vmatprep.subr.bf16.mxu0 0
    %1869 = vmatpush1.bf16.msra.mxu0 %v628
    %1870 = vmatprep.subr.bf16.mxu0 0
    %1871 = vmatpush1.bf16.msra.mxu0 %v629
    %1872 = vmatprep.subr.bf16.mxu0 0
    %1873 = vmatpush1.bf16.msra.mxu0 %v630
    %1874 = vmatprep.subr.bf16.mxu0 0
    %1875 = vmatpush1.bf16.msra.mxu0 %v631
    %1876 = vmatprep.subr.bf16.mxu0 0
    %1877 = vmatpush1.bf16.msra.mxu0 0
    %1878 = vmatprep.subr.bf16.mxu0 0
    %1879 = vmatpush1.bf16.msra.mxu0 0
    %1880 = vmatprep.subr.bf16.mxu0 0
    %1881 = vmatpush1.bf16.msra.mxu0 0
    %1882 = vmatprep.subr.bf16.mxu0 0
    %1883 = vmatpush1.bf16.msra.mxu0 0
    %1884 = vmatprep.subr.bf16.mxu0 0
    %1885 = vmatpush1.bf16.msra.mxu0 0
    %1886 = vmatprep.subr.bf16.mxu0 0
    %1887 = vmatpush1.bf16.msra.mxu0 0
    %1888 = vmatprep.subr.bf16.mxu0 0
    %1889 = vmatpush1.bf16.msra.mxu0 0
    %1890 = vmatprep.subr.bf16.mxu0 0
    %1891 = vmatpush1.bf16.msra.mxu0 0
    %1892 = vmatprep.mubr.bf16.mxu0 0
    %1893 = vmatmul.mubr.bf16.gmra.mrb[0].mxu0 %v1807
    %v1894 = vpop.f32.mrb[0].mxu0
    %v1895 = vadd.f32 0.0, %v1894
    %v1896 = vpop.f32.mrb[0].mxu0
    %v1897 = vpop.f32.mrb[0].mxu0
    %v1898 = vpop.f32.mrb[0].mxu0
    %1899 = vdwg.mxu0
    %v1900 = vadd.f32 %v1812, %v1895
    %v1901 = vmul.f32 %v1900, 0.5
    %v1902 = vtanh.pop %v1901
    %v1903 = vmul.f32 %v1902, 0.5
    %v1904 = vadd.f32 %v1903, 0.5
    %1905 = vmatprep.subr.bf16.mxu0 0
    %1906 = vmatpush1.bf16.msra.mxu0 %v717
    %1907 = vmatprep.subr.bf16.mxu0 0
    %1908 = vmatpush1.bf16.msra.mxu0 %v718
    %1909 = vmatprep.subr.bf16.mxu0 0
    %1910 = vmatpush1.bf16.msra.mxu0 %v719
    %1911 = vmatprep.subr.bf16.mxu0 0
    %1912 = vmatpush1.bf16.msra.mxu0 %v720
    %1913 = vmatprep.subr.bf16.mxu0 0
    %1914 = vmatpush1.bf16.msra.mxu0 %v721
    %1915 = vmatprep.subr.bf16.mxu0 0
    %1916 = vmatpush1.bf16.msra.mxu0 %v722
    %1917 = vmatprep.subr.bf16.mxu0 0
    %1918 = vmatpush1.bf16.msra.mxu0 %v723
    %1919 = vmatprep.subr.bf16.mxu0 0
    %1920 = vmatpush1.bf16.msra.mxu0 %v724
    %1921 = vmatprep.subr.bf16.mxu0 0
    %1922 = vmatpush1.bf16.msra.mxu0 0
    %1923 = vmatprep.subr.bf16.mxu0 0
    %1924 = vmatpush1.bf16.msra.mxu0 0
    %1925 = vmatprep.subr.bf16.mxu0 0
    %1926 = vmatpush1.bf16.msra.mxu0 0
    %1927 = vmatprep.subr.bf16.mxu0 0
    %1928 = vmatpush1.bf16.msra.mxu0 0
    %1929 = vmatprep.subr.bf16.mxu0 0
    %1930 = vmatpush1.bf16.msra.mxu0 0
    %1931 = vmatprep.subr.bf16.mxu0 0
    %1932 = vmatpush1.bf16.msra.mxu0 0
    %1933 = vmatprep.subr.bf16.mxu0 0
    %1934 = vmatpush1.bf16.msra.mxu0 0
    %1935 = vmatprep.subr.bf16.mxu0 0
    %1936 = vmatpush1.bf16.msra.mxu0 0
    %1937 = vmatprep.mubr.bf16.mxu0 0
    %1938 = vmatmul.mubr.bf16.gmra.mrb[0].mxu0 %v1807
    %v1939 = vpop.f32.mrb[0].mxu0
    %v1940 = vadd.f32 0.0, %v1939
    %v1941 = vpop.f32.mrb[0].mxu0
    %v1942 = vpop.f32.mrb[0].mxu0
    %v1943 = vpop.f32.mrb[0].mxu0
    %1944 = vdwg.mxu0
    %v1945 = vadd.f32 %v1813, %v1940
    %v1946 = vtanh.pop %v1945
    %1947 = vmatprep.subr.bf16.mxu0 0
    %1948 = vmatpush1.bf16.msra.mxu0 %v791
    %1949 = vmatprep.subr.bf16.mxu0 0
    %1950 = vmatpush1.bf16.msra.mxu0 %v792
    %1951 = vmatprep.subr.bf16.mxu0 0
    %1952 = vmatpush1.bf16.msra.mxu0 %v793
    %1953 = vmatprep.subr.bf16.mxu0 0
    %1954 = vmatpush1.bf16.msra.mxu0 %v794
    %1955 = vmatprep.subr.bf16.mxu0 0
    %1956 = vmatpush1.bf16.msra.mxu0 %v795
    %1957 = vmatprep.subr.bf16.mxu0 0
    %1958 = vmatpush1.bf16.msra.mxu0 %v796
    %1959 = vmatprep.subr.bf16.mxu0 0
    %1960 = vmatpush1.bf16.msra.mxu0 %v797
    %1961 = vmatprep.subr.bf16.mxu0 0
    %1962 = vmatpush1.bf16.msra.mxu0 %v798
    %1963 = vmatprep.subr.bf16.mxu0 0
    %1964 = vmatpush1.bf16.msra.mxu0 0
    %1965 = vmatprep.subr.bf16.mxu0 0
    %1966 = vmatpush1.bf16.msra.mxu0 0
    %1967 = vmatprep.subr.bf16.mxu0 0
    %1968 = vmatpush1.bf16.msra.mxu0 0
    %1969 = vmatprep.subr.bf16.mxu0 0
    %1970 = vmatpush1.bf16.msra.mxu0 0
    %1971 = vmatprep.subr.bf16.mxu0 0
    %1972 = vmatpush1.bf16.msra.mxu0 0
    %1973 = vmatprep.subr.bf16.mxu0 0
    %1974 = vmatpush1.bf16.msra.mxu0 0
    %1975 = vmatprep.subr.bf16.mxu0 0
    %1976 = vmatpush1.bf16.msra.mxu0 0
    %1977 = vmatprep.subr.bf16.mxu0 0
    %1978 = vmatpush1.bf16.msra.mxu0 0
    %1979 = vmatprep.mubr.bf16.mxu0 0
    %1980 = vmatmul.mubr.bf16.gmra.mrb[0].mxu0 %v1807
    %v1981 = vpop.f32.mrb[0].mxu0
    %v1982 = vadd.f32 0.0, %v1981
    %v1983 = vpop.f32.mrb[0].mxu0
    %v1984 = vpop.f32.mrb[0].mxu0
    %v1985 = vpop.f32.mrb[0].mxu0
    %1986 = vdwg.mxu0
    %v1987 = vadd.f32 %v1814, %v1982
    %v1988 = vmul.f32 %v1987, 0.5
    %v1989 = vtanh.pop %v1988
    %v1990 = vmul.f32 %v1989, 0.5
    %v1991 = vadd.f32 %v1990, 0.5
    %v1992 = vmul.f32 %v1904, %v1804
    %v1993 = vmul.f32 %v1859, %v1946
    %v1994 = vadd.f32 %v1992, %v1993
    %v1995 = vtanh.pop %v1994
    %v1996 = vmul.f32 %v1991, %v1995
    %v1997 = vpack.c.bf16 %v1996, %v1996
    %s1998 = smul.u32 7, 4
    %s1999 = smul.addr %s1998, 8
    %s2000 = scalar_lea.vmem [#allocation2], %s1999
    %v2001 = vld [vmem:[%s2000] sm:$0xff]
    %v2002 = vld [vmem:[%s2000 + $0x8] sm:$0xff]
    %v2003 = vld [vmem:[%s2000 + $0x10] sm:$0xff]
    %v2004 = vld [vmem:[%s2000 + $0x18] sm:$0xff]
    %2005 = vmatprep.subr.bf16.mxu0 0
    %2006 = vmatpush1.bf16.msra.mxu0 %v547
    %2007 = vmatprep.subr.bf16.mxu0 0
    %2008 = vmatpush1.bf16.msra.mxu0 %v548
    %2009 = vmatprep.subr.bf16.mxu0 0
    %2010 = vmatpush1.bf16.msra.mxu0 %v549
    %2011 = vmatprep.subr.bf16.mxu0 0
    %2012 = vmatpush1.bf16.msra.mxu0 %v550
    %2013 = vmatprep.subr.bf16.mxu0 0
    %2014 = vmatpush1.bf16.msra.mxu0 %v551
    %2015 = vmatprep.subr.bf16.mxu0 0
    %2016 = vmatpush1.bf16.msra.mxu0 %v552
    %2017 = vmatprep.subr.bf16.mxu0 0
    %2018 = vmatpush1.bf16.msra.mxu0 %v553
    %2019 = vmatprep.subr.bf16.mxu0 0
    %2020 = vmatpush1.bf16.msra.mxu0 %v554
    %2021 = vmatprep.subr.bf16.mxu0 0
    %2022 = vmatpush1.bf16.msra.mxu0 0
    %2023 = vmatprep.subr.bf16.mxu0 0
    %2024 = vmatpush1.bf16.msra.mxu0 0
    %2025 = vmatprep.subr.bf16.mxu0 0
    %2026 = vmatpush1.bf16.msra.mxu0 0
    %2027 = vmatprep.subr.bf16.mxu0 0
    %2028 = vmatpush1.bf16.msra.mxu0 0
    %2029 = vmatprep.subr.bf16.mxu0 0
    %2030 = vmatpush1.bf16.msra.mxu0 0
    %2031 = vmatprep.subr.bf16.mxu0 0
    %2032 = vmatpush1.bf16.msra.mxu0 0
    %2033 = vmatprep.subr.bf16.mxu0 0
    %2034 = vmatpush1.bf16.msra.mxu0 0
    %2035 = vmatprep.subr.bf16.mxu0 0
    %2036 = vmatpush1.bf16.msra.mxu0 0
    %2037 = vmatprep.mubr.bf16.mxu0 0
    %2038 = vmatmul.mubr.bf16.gmra.mrb[0].mxu0 %v1997
    %v2039 = vpop.f32.mrb[0].mxu0
    %v2040 = vadd.f32 0.0, %v2039
    %v2041 = vpop.f32.mrb[0].mxu0
    %v2042 = vpop.f32.mrb[0].mxu0
    %v2043 = vpop.f32.mrb[0].mxu0
    %2044 = vdwg.mxu0
    %v2045 = vadd.f32 %v2001, %v2040
    %v2046 = vmul.f32 %v2045, 0.5
    %v2047 = vtanh.pop %v2046
    %v2048 = vmul.f32 %v2047, 0.5
    %v2049 = vadd.f32 %v2048, 0.5
    %2050 = vmatprep.subr.bf16.mxu0 0
    %2051 = vmatpush1.bf16.msra.mxu0 %v624
    %2052 = vmatprep.subr.bf16.mxu0 0
    %2053 = vmatpush1.bf16.msra.mxu0 %v625
    %2054 = vmatprep.subr.bf16.mxu0 0
    %2055 = vmatpush1.bf16.msra.mxu0 %v626
    %2056 = vmatprep.subr.bf16.mxu0 0
    %2057 = vmatpush1.bf16.msra.mxu0 %v627
    %2058 = vmatprep.subr.bf16.mxu0 0
    %2059 = vmatpush1.bf16.msra.mxu0 %v628
    %2060 = vmatprep.subr.bf16.mxu0 0
    %2061 = vmatpush1.bf16.msra.mxu0 %v629
    %2062 = vmatprep.subr.bf16.mxu0 0
    %2063 = vmatpush1.bf16.msra.mxu0 %v630
    %2064 = vmatprep.subr.bf16.mxu0 0
    %2065 = vmatpush1.bf16.msra.mxu0 %v631
    %2066 = vmatprep.subr.bf16.mxu0 0
    %2067 = vmatpush1.bf16.msra.mxu0 0
    %2068 = vmatprep.subr.bf16.mxu0 0
    %2069 = vmatpush1.bf16.msra.mxu0 0
    %2070 = vmatprep.subr.bf16.mxu0 0
    %2071 = vmatpush1.bf16.msra.mxu0 0
    %2072 = vmatprep.subr.bf16.mxu0 0
    %2073 = vmatpush1.bf16.msra.mxu0 0
    %2074 = vmatprep.subr.bf16.mxu0 0
    %2075 = vmatpush1.bf16.msra.mxu0 0
    %2076 = vmatprep.subr.bf16.mxu0 0
    %2077 = vmatpush1.bf16.msra.mxu0 0
    %2078 = vmatprep.subr.bf16.mxu0 0
    %2079 = vmatpush1.bf16.msra.mxu0 0
    %2080 = vmatprep.subr.bf16.mxu0 0
    %2081 = vmatpush1.bf16.msra.mxu0 0
    %2082 = vmatprep.mubr.bf16.mxu0 0
    %2083 = vmatmul.mubr.bf16.gmra.mrb[0].mxu0 %v1997
    %v2084 = vpop.f32.mrb[0].mxu0
    %v2085 = vadd.f32 0.0, %v2084
    %v2086 = vpop.f32.mrb[0].mxu0
    %v2087 = vpop.f32.mrb[0].mxu0
    %v2088 = vpop.f32.mrb[0].mxu0
    %2089 = vdwg.mxu0
    %v2090 = vadd.f32 %v2002, %v2085
    %v2091 = vmul.f32 %v2090, 0.5
    %v2092 = vtanh.pop %v2091
    %v2093 = vmul.f32 %v2092, 0.5
    %v2094 = vadd.f32 %v2093, 0.5
    %2095 = vmatprep.subr.bf16.mxu0 0
    %2096 = vmatpush1.bf16.msra.mxu0 %v717
    %2097 = vmatprep.subr.bf16.mxu0 0
    %2098 = vmatpush1.bf16.msra.mxu0 %v718
    %2099 = vmatprep.subr.bf16.mxu0 0
    %2100 = vmatpush1.bf16.msra.mxu0 %v719
    %2101 = vmatprep.subr.bf16.mxu0 0
    %2102 = vmatpush1.bf16.msra.mxu0 %v720
    %2103 = vmatprep.subr.bf16.mxu0 0
    %2104 = vmatpush1.bf16.msra.mxu0 %v721
    %2105 = vmatprep.subr.bf16.mxu0 0
    %2106 = vmatpush1.bf16.msra.mxu0 %v722
    %2107 = vmatprep.subr.bf16.mxu0 0
    %2108 = vmatpush1.bf16.msra.mxu0 %v723
    %2109 = vmatprep.subr.bf16.mxu0 0
    %2110 = vmatpush1.bf16.msra.mxu0 %v724
    %2111 = vmatprep.subr.bf16.mxu0 0
    %2112 = vmatpush1.bf16.msra.mxu0 0
    %2113 = vmatprep.subr.bf16.mxu0 0
    %2114 = vmatpush1.bf16.msra.mxu0 0
    %2115 = vmatprep.subr.bf16.mxu0 0
    %2116 = vmatpush1.bf16.msra.mxu0 0
    %2117 = vmatprep.subr.bf16.mxu0 0
    %2118 = vmatpush1.bf16.msra.mxu0 0
    %2119 = vmatprep.subr.bf16.mxu0 0
    %2120 = vmatpush1.bf16.msra.mxu0 0
    %2121 = vmatprep.subr.bf16.mxu0 0
    %2122 = vmatpush1.bf16.msra.mxu0 0
    %2123 = vmatprep.subr.bf16.mxu0 0
    %2124 = vmatpush1.bf16.msra.mxu0 0
    %2125 = vmatprep.subr.bf16.mxu0 0
    %2126 = vmatpush1.bf16.msra.mxu0 0
    %2127 = vmatprep.mubr.bf16.mxu0 0
    %2128 = vmatmul.mubr.bf16.gmra.mrb[0].mxu0 %v1997
    %v2129 = vpop.f32.mrb[0].mxu0
    %v2130 = vadd.f32 0.0, %v2129
    %v2131 = vpop.f32.mrb[0].mxu0
    %v2132 = vpop.f32.mrb[0].mxu0
    %v2133 = vpop.f32.mrb[0].mxu0
    %2134 = vdwg.mxu0
    %v2135 = vadd.f32 %v2003, %v2130
    %v2136 = vtanh.pop %v2135
    %2137 = vmatprep.subr.bf16.mxu0 0
    %2138 = vmatpush1.bf16.msra.mxu0 %v791
    %2139 = vmatprep.subr.bf16.mxu0 0
    %2140 = vmatpush1.bf16.msra.mxu0 %v792
    %2141 = vmatprep.subr.bf16.mxu0 0
    %2142 = vmatpush1.bf16.msra.mxu0 %v793
    %2143 = vmatprep.subr.bf16.mxu0 0
    %2144 = vmatpush1.bf16.msra.mxu0 %v794
    %2145 = vmatprep.subr.bf16.mxu0 0
    %2146 = vmatpush1.bf16.msra.mxu0 %v795
    %2147 = vmatprep.subr.bf16.mxu0 0
    %2148 = vmatpush1.bf16.msra.mxu0 %v796
    %2149 = vmatprep.subr.bf16.mxu0 0
    %2150 = vmatpush1.bf16.msra.mxu0 %v797
    %2151 = vmatprep.subr.bf16.mxu0 0
    %2152 = vmatpush1.bf16.msra.mxu0 %v798
    %2153 = vmatprep.subr.bf16.mxu0 0
    %2154 = vmatpush1.bf16.msra.mxu0 0
    %2155 = vmatprep.subr.bf16.mxu0 0
    %2156 = vmatpush1.bf16.msra.mxu0 0
    %2157 = vmatprep.subr.bf16.mxu0 0
    %2158 = vmatpush1.bf16.msra.mxu0 0
    %2159 = vmatprep.subr.bf16.mxu0 0
    %2160 = vmatpush1.bf16.msra.mxu0 0
    %2161 = vmatprep.subr.bf16.mxu0 0
    %2162 = vmatpush1.bf16.msra.mxu0 0
    %2163 = vmatprep.subr.bf16.mxu0 0
    %2164 = vmatpush1.bf16.msra.mxu0 0
    %2165 = vmatprep.subr.bf16.mxu0 0
    %2166 = vmatpush1.bf16.msra.mxu0 0
    %2167 = vmatprep.subr.bf16.mxu0 0
    %2168 = vmatpush1.bf16.msra.mxu0 0
    %2169 = vmatprep.mubr.bf16.mxu0 0
    %2170 = vmatmul.mubr.bf16.gmra.mrb[0].mxu0 %v1997
    %v2171 = vpop.f32.mrb[0].mxu0
    %v2172 = vadd.f32 0.0, %v2171
    %v2173 = vpop.f32.mrb[0].mxu0
    %v2174 = vpop.f32.mrb[0].mxu0
    %v2175 = vpop.f32.mrb[0].mxu0
    %2176 = vdwg.mxu0
    %v2177 = vadd.f32 %v2004, %v2172
    %v2178 = vmul.f32 %v2177, 0.5
    %v2179 = vtanh.pop %v2178
    %v2180 = vmul.f32 %v2179, 0.5
    %v2181 = vadd.f32 %v2180, 0.5
    %v2182 = vmul.f32 %v2094, %v1994
    %v2183 = vmul.f32 %v2049, %v2136
    %v2184 = vadd.f32 %v2182, %v2183
    %v2185 = vtanh.pop %v2184
    %v2186 = vmul.f32 %v2181, %v2185
    %v2187 = vpack.c.bf16 %v2186, %v2186
    %v2188 = vld [vmem:[%s4] sm:$0xf]
    %v2189 = vld [vmem:[%s4 + $0x4] sm:$0xf]
    %v2190 = vld [vmem:[%s4 + $0x8] sm:$0xf]
    %v2191 = vld [vmem:[%s4 + $0xc] sm:$0xf]
    %v2192 = vld [vmem:[%s4 + $0x10] sm:$0xf]
    %v2193 = vld [vmem:[%s4 + $0x14] sm:$0xf]
    %v2194 = vld [vmem:[%s4 + $0x18] sm:$0xf]
    %v2195 = vld [vmem:[%s4 + $0x1c] sm:$0xf]
    %v2196 = vld [vmem:[%s4 + $0x20] sm:$0xf]
    %v2197 = vld [vmem:[%s4 + $0x24] sm:$0xf]
    %v2198 = vld [vmem:[%s4 + $0x28] sm:$0xf]
    %v2199 = vld [vmem:[%s4 + $0x2c] sm:$0xf]
    %v2200 = vld [vmem:[%s4 + $0x30] sm:$0xf]
    %v2201 = vld [vmem:[%s4 + $0x34] sm:$0xf]
    %v2202 = vld [vmem:[%s4 + $0x38] sm:$0xf]
    %v2203 = vld [vmem:[%s4 + $0x3c] sm:$0xf]
    %v2204 = vld [vmem:[%s5] sm:$0x1]
    %v2206 = vlaneseq
    %v2207 = vshrl.u32 %v2206, 7
    %v2208 = vsub.s32 0, %v2207
    %v2209 = vrot.slane %v2204, %v2208
    %v2227 = vunpack.c.l.b16 %v2188
    %v2228 = vunpack.c.l.b16 %v2189
    %v2229 = vunpack.c.l.b16 %v2190
    %v2230 = vunpack.c.l.b16 %v2191
    %v2231 = vunpack.c.l.b16 %v2192
    %v2232 = vunpack.c.l.b16 %v2193
    %v2233 = vunpack.c.l.b16 %v2194
    %v2234 = vunpack.c.l.b16 %v2195
    %v2235 = vunpack.c.l.b16 %v2196
    %v2236 = vunpack.c.l.b16 %v2197
    %v2237 = vunpack.c.l.b16 %v2198
    %v2238 = vunpack.c.l.b16 %v2199
    %v2239 = vunpack.c.l.b16 %v2200
    %v2240 = vunpack.c.l.b16 %v2201
    %v2241 = vunpack.c.l.b16 %v2202
    %v2242 = vunpack.c.l.b16 %v2203
    %v2243 = vpack.c.b16 %v2228, %v2227
    %v2244 = vpack.c.b16 %v2230, %v2229
    %v2245 = vpack.c.b16 %v2232, %v2231
    %v2246 = vpack.c.b16 %v2234, %v2233
    %v2247 = vpack.c.b16 %v2236, %v2235
    %v2248 = vpack.c.b16 %v2238, %v2237
    %v2249 = vpack.c.b16 %v2240, %v2239
    %v2250 = vpack.c.b16 %v2242, %v2241
    %2259 = vmatprep.subr.bf16.mxu0 0
    %2260 = vmatpush1.bf16.msra.mxu0 %v2243
    %2261 = vmatprep.subr.bf16.mxu0 0
    %2262 = vmatpush1.bf16.msra.mxu0 %v2244
    %2263 = vmatprep.subr.bf16.mxu0 0
    %2264 = vmatpush1.bf16.msra.mxu0 %v2245
    %2265 = vmatprep.subr.bf16.mxu0 0
    %2266 = vmatpush1.bf16.msra.mxu0 %v2246
    %2267 = vmatprep.subr.bf16.mxu0 0
    %2268 = vmatpush1.bf16.msra.mxu0 %v2247
    %2269 = vmatprep.subr.bf16.mxu0 0
    %2270 = vmatpush1.bf16.msra.mxu0 %v2248
    %2271 = vmatprep.subr.bf16.mxu0 0
    %2272 = vmatpush1.bf16.msra.mxu0 %v2249
    %2273 = vmatprep.subr.bf16.mxu0 0
    %2274 = vmatpush1.bf16.msra.mxu0 %v2250
    %2275 = vmatprep.subr.bf16.mxu0 0
    %2276 = vmatpush1.bf16.msra.mxu0 0
    %2277 = vmatprep.subr.bf16.mxu0 0
    %2278 = vmatpush1.bf16.msra.mxu0 0
    %2279 = vmatprep.subr.bf16.mxu0 0
    %2280 = vmatpush1.bf16.msra.mxu0 0
    %2281 = vmatprep.subr.bf16.mxu0 0
    %2282 = vmatpush1.bf16.msra.mxu0 0
    %2283 = vmatprep.subr.bf16.mxu0 0
    %2284 = vmatpush1.bf16.msra.mxu0 0
    %2285 = vmatprep.subr.bf16.mxu0 0
    %2286 = vmatpush1.bf16.msra.mxu0 0
    %2287 = vmatprep.subr.bf16.mxu0 0
    %2288 = vmatpush1.bf16.msra.mxu0 0
    %2289 = vmatprep.subr.bf16.mxu0 0
    %2290 = vmatpush1.bf16.msra.mxu0 0
    %2291 = vmatprep.mubr.bf16.mxu0 0
    %2292 = vmatmul.mubr.bf16.gmra.mrb[0].mxu0 %v2187
    %v2293 = vpop.f32.mrb[0].mxu0
    %v2294 = vadd.f32 %v2209, %v2293
    %v2295 = vpop.f32.mrb[0].mxu0
    %v2296 = vpop.f32.mrb[0].mxu0
    %v2297 = vpop.f32.mrb[0].mxu0
    %2298 = vdwg.mxu0
    %v2299 = vmul.f32 %v2294, 0.5
    %v2300 = vtanh.pop %v2299
    %v2301 = vmul.f32 %v2300, 0.5
    %v2302 = vadd.f32 %v2301, 0.5
    %2303 = vst [vmem:[%s6] sm:$0xff] %v2302
    // Predicated region
    $region34: #{lstm_seq2one.1} parent=1 // pred_check
      _
    $region35: #{lstm_seq2one.1} parent=1 // pred_check_branch
      %2305 = sbr.rel (0) target = $region37
    $region36: #{lstm_seq2one.1} parent=1 // pred_region
      _
    $region37: #{lstm_seq2one.1} parent=1 // pred_fallthru
      _
    // Predicated region
    $region38: #{lstm_seq2one.1} parent=1 // pred_check
      _
    $region39: #{lstm_seq2one.1} parent=1 // pred_check_branch
      %2307 = sbr.rel (0) target = $region41
    $region40: #{lstm_seq2one.1} parent=1 // pred_region
      _
    $region41: #{lstm_seq2one.1} parent=1 // pred_fallthru
      _
    %2308 = vsyncpa [#allocation4], 1
    %2309 = vsyncpa [#allocation6], 1

</llo_original>
